<compile_context>
chip_gen: v5e
topology: v5e:2x2
jax: 0.10.0
libtpu: 0.0.40
codegen_flags: <defaults>
</compile_context>

<pallas_src>
import functools
import math

import jax
import jax.numpy as jnp
from jax import lax
from jax.experimental import pallas as pl
from jax.experimental.pallas import tpu as pltpu


# --------------------- stage 1: LorentzLinear q/k projection -----------------
def _lorentz_qk_kernel(x_ref, wq_ref, bq_ref, wk_ref, bk_ref, q_ref, k_ref, *,
                       c, c_sqrt, scale_q, scale_k, inv2_scale):
    d = q_ref.shape[-1]
    lane = lax.broadcasted_iota(jnp.int32, (1, d), 1)
    is_time = lane == 0                                    # (1, D) lane mask

    x = x_ref[...].astype(jnp.float32)                     # (TM, D)

    # Weights are pre-transposed in the wrapper -> no in-kernel transpose.
    hq = jnp.dot(x, wq_ref[...], preferred_element_type=jnp.float32) + bq_ref[...]
    hk = jnp.dot(x, wk_ref[...], preferred_element_type=jnp.float32) + bk_ref[...]

    def project(h, scale_exp):
        # time = sigmoid(h0)*scale + (sqrt(c)+0.5); rescale the spatial part so
        # the point lies on the hyperboloid.  Mask-select instead of concat,
        # rsqrt instead of divide.
        time = jax.nn.sigmoid(h[:, 0:1]) * scale_exp + (c_sqrt + 0.5)
        narrow = jnp.where(is_time, 0.0, h)
        sq = jnp.maximum(jnp.sum(narrow * narrow, axis=-1, keepdims=True), 1e-8)
        s = jnp.sqrt(jnp.maximum(time * time - c, 1e-8)) * lax.rsqrt(sq)
        return jnp.where(is_time, time, h * s)

    q = project(hq, scale_q)                               # (TM, D)
    k = project(hk, scale_k)                               # (TM, D)

    # Fold Minkowski sign flip and 2/att_scale into q so the N^2 kernel is lean.
    sign_scale = jnp.where(is_time, -inv2_scale, inv2_scale)
    q_ref[...] = (q * sign_scale).astype(q_ref.dtype)
    k_ref[...] = k.astype(k_ref.dtype)


# ------------- stage 2: attention, aggregation, Lorentz normalization --------
def _lorentz_agg_kernel(q_ref, k_ref, adj_ref, xb_ref, o_ref, *, c_sqrt,
                        att_const):
    d = o_ref.shape[-1]
    lane = lax.broadcasted_iota(jnp.int32, (1, d), 1)
    is_time = lane == 0                                    # (1, D) lane mask

    qs = q_ref[...]                                        # (TM, D) f32, pre-scaled
    k = k_ref[...]                                         # (N, D)  f32, resident
    adj = adj_ref[...]                                     # (TM, N) bf16 mask

    # cinner with sign/scale already folded in; contract both last dims -> no
    # transposed k materialized.
    logits = lax.dot_general(qs, k, (((1,), (1,)), ((), ())),
                             preferred_element_type=jnp.float32)   # (TM, N)

    # att = sigmoid((2 + 2*cinner)/scale + bias), masked by adjacency.
    att = jax.nn.sigmoid(logits + att_const)
    att = att.astype(jnp.bfloat16) * adj                   # (TM, N) bf16

    # Aggregation: bf16 operands, f32 accumulate on the MXU.
    support = jnp.dot(att, xb_ref[...],
                      preferred_element_type=jnp.float32)  # (TM, D)

    # Lorentz normalization: out = support * sqrt(c) * rsqrt(|t^2 - |r|^2|).
    t = support[:, 0:1]
    rest = jnp.where(is_time, 0.0, support)
    rest_sq = jnp.sum(rest * rest, axis=-1, keepdims=True)
    inv_denom = c_sqrt * lax.rsqrt(jnp.maximum(jnp.abs(t * t - rest_sq), 1e-8))
    o_ref[...] = (support * inv_denom).astype(o_ref.dtype)


def lorentz_agg(x, adj, wq, bq, wk, bk, *, c, scale_q_exp, scale_k_exp,
                att_scale, att_bias, block_m=256):
    N, D = x.shape
    block_m = min(block_m, N)
    if N % block_m != 0:
        block_m = N                      # fall back to one tile: exact blocks
    grid_m = N // block_m

    # Host-side prep (free): pre-transpose weights, reshape biases, bf16 copies.
    wq_t = wq.T                                   # (D_in, D_out)
    wk_t = wk.T
    bq2 = bq.reshape(1, D).astype(jnp.float32)
    bk2 = bk.reshape(1, D).astype(jnp.float32)
    adj_b = adj.astype(jnp.bfloat16)              # 0/1 mask: exact in bf16
    x_b = x.astype(jnp.bfloat16)                  # aggregation operand only

    c_sqrt = math.sqrt(float(c))

    # ---- stage 1: q/k projection (O(N*D^2)), computed exactly once ----------
    proj_kernel = functools.partial(
        _lorentz_qk_kernel,
        c=float(c), c_sqrt=c_sqrt,
        scale_q=float(scale_q_exp), scale_k=float(scale_k_exp),
        inv2_scale=2.0 / float(att_scale))

    qs, k = pl.pallas_call(
        proj_kernel,
        out_shape=(jax.ShapeDtypeStruct((N, D), jnp.float32),
                   jax.ShapeDtypeStruct((N, D), jnp.float32)),
        grid_spec=pltpu.PrefetchScalarGridSpec(
            num_scalar_prefetch=0,
            grid=(grid_m,),
            in_specs=[
                pl.BlockSpec((block_m, D), lambda i: (i, 0)),    # x row tile
                pl.BlockSpec((D, D), lambda i: (0, 0)),          # wq^T
                pl.BlockSpec((1, D), lambda i: (0, 0)),          # bq
                pl.BlockSpec((D, D), lambda i: (0, 0)),          # wk^T
                pl.BlockSpec((1, D), lambda i: (0, 0)),          # bk
            ],
            out_specs=(pl.BlockSpec((block_m, D), lambda i: (i, 0)),
                       pl.BlockSpec((block_m, D), lambda i: (i, 0))),
        ),
        compiler_params=pltpu.CompilerParams(
            dimension_semantics=("parallel",)),
        cost_estimate=pl.CostEstimate(
            flops=int(4 * N * D * D),
            transcendentals=int(2 * N),
            bytes_accessed=int(3 * N * D * 4 + 2 * D * D * 4)),
    )(x, wq_t, bq2, wk_t, bk2)

    # ---- stage 2: attention + aggregation + normalization (O(N^2*D)) --------
    agg_kernel = functools.partial(
        _lorentz_agg_kernel,
        c_sqrt=c_sqrt,
        att_const=2.0 / float(att_scale) + float(att_bias))

    return pl.pallas_call(
        agg_kernel,
        out_shape=jax.ShapeDtypeStruct((N, D), x.dtype),
        grid_spec=pltpu.PrefetchScalarGridSpec(
            num_scalar_prefetch=0,
            grid=(grid_m,),
            in_specs=[
                pl.BlockSpec((block_m, D), lambda i: (i, 0)),    # q tile (pre-scaled)
                pl.BlockSpec((N, D), lambda i: (0, 0)),          # k (resident)
                pl.BlockSpec((block_m, N), lambda i: (i, 0)),    # adj row tile (bf16)
                pl.BlockSpec((N, D), lambda i: (0, 0)),          # x bf16 (resident)
            ],
            out_specs=pl.BlockSpec((block_m, D), lambda i: (i, 0)),
        ),
        compiler_params=pltpu.CompilerParams(
            dimension_semantics=("parallel",),
            vmem_limit_bytes=64 * 1024 * 1024),
        cost_estimate=pl.CostEstimate(
            flops=int(4 * N * N * D),
            transcendentals=int(N * N),
            bytes_accessed=int(N * N * 2 + 2 * N * D * 4 + 2 * N * D * 2)),
    )(qs, k, adj_b, x_b)


# ----------------------------- pure-JAX reference ---------------------------
def _reference(x, adj, wq, bq, wk, bk, *, c, scale_q_exp, scale_k_exp,
               att_scale, att_bias):
    c_sqrt = math.sqrt(c)

    def ll(xx, w, b, se):
        h = xx @ w.T + b
        time = jax.nn.sigmoid(h[:, :1]) * se + (c_sqrt + 0.5)
        nar = h[:, 1:]
        sq = jnp.clip(jnp.sum(nar * nar, -1, keepdims=True), 1e-8)
        s = (time * time - c) / sq
        return jnp.concatenate([time, nar * jnp.sqrt(jnp.clip(s, 1e-8))], -1)

    q = ll(x, wq, bq, scale_q_exp)
    k = ll(x, wk, bk, scale_k_exp)
    q_neg = jnp.concatenate([-q[:, :1], q[:, 1:]], -1)
    att = jax.nn.sigmoid((2.0 + 2.0 * (q_neg @ k.T)) / att_scale + att_bias)
    support = (adj * att) @ x
    mink = -support[:, :1] ** 2 + jnp.sum(support[:, 1:] ** 2, -1, keepdims=True)
    denom = jnp.sqrt(jnp.clip(jnp.abs(-mink), 1e-8)) / c_sqrt
    return support / denom


if __name__ == "__main__":
    N, D = 256, 32          # N nodes, in_features = D
    c = 1.0                 # curvature
    in_features = D

    key = jax.random.PRNGKey(0)
    kx, kadj, kwq, kwk = jax.random.split(key, 4)

    x = jax.random.normal(kx, (N, D), dtype=jnp.float32)
    adj = (jax.random.uniform(kadj, (N, N)) < 0.3).astype(jnp.float32)

    # LorentzLinear.reset_parameters: uniform(-stdv, stdv), column 0 zeroed,
    # bias = 0.  scale param = log(10) -> exp().clamp_max(10) == 10.
    stdv = 1.0 / math.sqrt(in_features)
    wq = jax.random.uniform(kwq, (D, D), jnp.float32, -stdv, stdv).at[:, 0].set(0.0)
    wk = jax.random.uniform(kwk, (D, D), jnp.float32, -stdv, stdv).at[:, 0].set(0.0)
    bq = jnp.zeros((1, D), jnp.float32)
    bk = jnp.zeros((1, D), jnp.float32)

    params = dict(
        c=c,
        scale_q_exp=min(math.exp(math.log(10.0)), 10.0),
        scale_k_exp=min(math.exp(math.log(10.0)), 10.0),
        att_scale=math.sqrt(in_features),   # self.scale init
        att_bias=20.0,                      # self.bias init
    )

    out = lorentz_agg(x, adj, wq, bq, wk, bk, block_m=128, **params)
    out = jax.block_until_ready(out)

    ref = _reference(x, adj, wq, bq, wk, bk, **params)
    assert out.shape == (N, D)
    # bf16 operands in the aggregation matmul -> slightly looser tolerance
    # than a pure-f32 comparison.
    max_err = float(jnp.max(jnp.abs(out - ref)))
    assert jnp.allclose(out, ref, atol=5e-2, rtol=5e-2), max_err
    print("KERNEL_OK")
</pallas_src>

<mosaic_0001>
module attributes {stable_mosaic.version = 11 : i64} {
  func.func @_lorentz_qk_kernel(%arg0: i32, %arg1: memref<128x32xf32, #tpu.memory_space<vmem>>, %arg2: memref<32x32xf32, #tpu.memory_space<vmem>>, %arg3: memref<1x32xf32, #tpu.memory_space<vmem>>, %arg4: memref<32x32xf32, #tpu.memory_space<vmem>>, %arg5: memref<1x32xf32, #tpu.memory_space<vmem>>, %arg6: memref<128x32xf32, #tpu.memory_space<vmem>>, %arg7: memref<128x32xf32, #tpu.memory_space<vmem>>) attributes {dimension_semantics = [#tpu.dimension_semantics<parallel>], iteration_bounds = array<i64: 2>, scalar_prefetch = 0 : i64, scratch_operands = 0 : i64, tpu.core_type = #tpu.core_type<tc>, window_params = [{transform_indices = @transform_0, window_bounds = array<i64: 128, 32>}, {pipeline_mode = #tpu.pipeline_mode<synchronous>, transform_indices = @transform_1, window_bounds = array<i64: 32, 32>}, {pipeline_mode = #tpu.pipeline_mode<synchronous>, transform_indices = @transform_2, window_bounds = array<i64: 1, 32>}, {pipeline_mode = #tpu.pipeline_mode<synchronous>, transform_indices = @transform_3, window_bounds = array<i64: 32, 32>}, {pipeline_mode = #tpu.pipeline_mode<synchronous>, transform_indices = @transform_4, window_bounds = array<i64: 1, 32>}, {transform_indices = @transform_5, window_bounds = array<i64: 128, 32>}, {transform_indices = @transform_6, window_bounds = array<i64: 128, 32>}]} {
    %0 = tpu.iota {dimensions = array<i32: 1>} : vector<1x32xi32>
    %c0_i32 = arith.constant 0 : i32
    %1 = vector.broadcast %c0_i32 : i32 to vector<1x32xi32>
    %2 = arith.cmpi eq, %0, %1 : vector<1x32xi32>
    %c0 = arith.constant 0 : index
    %c0_0 = arith.constant 0 : index
    %3 = vector.load %arg1[%c0, %c0_0] : memref<128x32xf32, #tpu.memory_space<vmem>>, vector<128x32xf32>
    %c0_1 = arith.constant 0 : index
    %c0_2 = arith.constant 0 : index
    %4 = vector.load %arg2[%c0_1, %c0_2] : memref<32x32xf32, #tpu.memory_space<vmem>>, vector<32x32xf32>
    %cst = arith.constant dense<0.000000e+00> : vector<128x32xf32>
    %5 = tpu.matmul %3, %4, %cst {dimension_numbers = #tpu.dot_dimension_numbers<[1], [0], [0], [1], [0, 0, 1, 1], [], []>} : vector<128x32xf32>, vector<32x32xf32>, vector<128x32xf32> -> vector<128x32xf32>
    %c0_3 = arith.constant 0 : index
    %c0_4 = arith.constant 0 : index
    %6 = vector.load %arg3[%c0_3, %c0_4] : memref<1x32xf32, #tpu.memory_space<vmem>>, vector<1x32xf32>
    %7 = vector.broadcast %6 : vector<1x32xf32> to vector<128x32xf32>
    %8 = arith.addf %5, %7 : vector<128x32xf32>
    %c0_5 = arith.constant 0 : index
    %c0_6 = arith.constant 0 : index
    %9 = vector.load %arg4[%c0_5, %c0_6] : memref<32x32xf32, #tpu.memory_space<vmem>>, vector<32x32xf32>
    %cst_7 = arith.constant dense<0.000000e+00> : vector<128x32xf32>
    %10 = tpu.matmul %3, %9, %cst_7 {dimension_numbers = #tpu.dot_dimension_numbers<[1], [0], [0], [1], [0, 0, 1, 1], [], []>} : vector<128x32xf32>, vector<32x32xf32>, vector<128x32xf32> -> vector<128x32xf32>
    %c0_8 = arith.constant 0 : index
    %c0_9 = arith.constant 0 : index
    %11 = vector.load %arg5[%c0_8, %c0_9] : memref<1x32xf32, #tpu.memory_space<vmem>>, vector<1x32xf32>
    %12 = vector.broadcast %11 : vector<1x32xf32> to vector<128x32xf32>
    %13 = arith.addf %10, %12 : vector<128x32xf32>
    %14 = vector.extract_strided_slice %8 {offsets = [0, 0], sizes = [128, 1], strides = [1, 1]} : vector<128x32xf32> to vector<128x1xf32>
    %15 = arith.negf %14 : vector<128x1xf32>
    %16 = math.exp %15 : vector<128x1xf32>
    %cst_10 = arith.constant 1.000000e+00 : f32
    %17 = vector.broadcast %cst_10 : f32 to vector<128x1xf32>
    %18 = arith.addf %17, %16 : vector<128x1xf32>
    %19 = arith.divf %17, %18 : vector<128x1xf32>
    %cst_11 = arith.constant 1.000000e+01 : f32
    %20 = vector.broadcast %cst_11 : f32 to vector<128x1xf32>
    %21 = arith.mulf %19, %20 : vector<128x1xf32>
    %cst_12 = arith.constant 1.500000e+00 : f32
    %22 = vector.broadcast %cst_12 : f32 to vector<128x1xf32>
    %23 = arith.addf %21, %22 : vector<128x1xf32>
    %cst_13 = arith.constant 0.000000e+00 : f32
    %24 = vector.shape_cast %2 : vector<1x32xi1> to vector<1x32xi1>
    %25 = vector.broadcast %24 : vector<1x32xi1> to vector<128x32xi1>
    %26 = vector.broadcast %cst_13 : f32 to vector<128x32xf32>
    %27 = arith.select %25, %26, %8 : vector<128x32xi1>, vector<128x32xf32>
    %28 = arith.mulf %27, %27 : vector<128x32xf32>
    %cst_14 = arith.constant dense<0.000000e+00> : vector<128xf32>
    %29 = vector.multi_reduction <add>, %28, %cst_14 [1] : vector<128x32xf32> to vector<128xf32>
    %30 = vector.shape_cast %29 : vector<128xf32> to vector<128x1xf32>
    %cst_15 = arith.constant 9.99999993E-9 : f32
    %31 = vector.broadcast %cst_15 : f32 to vector<128x1xf32>
    %32 = arith.maximumf %30, %31 : vector<128x1xf32>
    %33 = arith.mulf %23, %23 : vector<128x1xf32>
    %cst_16 = arith.constant 1.000000e+00 : f32
    %34 = vector.broadcast %cst_16 : f32 to vector<128x1xf32>
    %35 = arith.subf %33, %34 : vector<128x1xf32>
    %cst_17 = arith.constant 9.99999993E-9 : f32
    %36 = vector.broadcast %cst_17 : f32 to vector<128x1xf32>
    %37 = arith.maximumf %35, %36 : vector<128x1xf32>
    %38 = math.sqrt %37 : vector<128x1xf32>
    %39 = math.rsqrt %32 : vector<128x1xf32>
    %40 = arith.mulf %38, %39 : vector<128x1xf32>
    %41 = vector.broadcast %40 : vector<128x1xf32> to vector<128x32xf32>
    %42 = arith.mulf %8, %41 : vector<128x32xf32>
    %43 = vector.shape_cast %2 : vector<1x32xi1> to vector<1x32xi1>
    %44 = vector.broadcast %43 : vector<1x32xi1> to vector<128x32xi1>
    %45 = vector.shape_cast %23 : vector<128x1xf32> to vector<128x1xf32>
    %46 = vector.broadcast %45 : vector<128x1xf32> to vector<128x32xf32>
    %47 = arith.select %44, %46, %42 : vector<128x32xi1>, vector<128x32xf32>
    %48 = vector.extract_strided_slice %13 {offsets = [0, 0], sizes = [128, 1], strides = [1, 1]} : vector<128x32xf32> to vector<128x1xf32>
    %49 = arith.negf %48 : vector<128x1xf32>
    %50 = math.exp %49 : vector<128x1xf32>
    %cst_18 = arith.constant 1.000000e+00 : f32
    %51 = vector.broadcast %cst_18 : f32 to vector<128x1xf32>
    %52 = arith.addf %51, %50 : vector<128x1xf32>
    %53 = arith.divf %51, %52 : vector<128x1xf32>
    %cst_19 = arith.constant 1.000000e+01 : f32
    %54 = vector.broadcast %cst_19 : f32 to vector<128x1xf32>
    %55 = arith.mulf %53, %54 : vector<128x1xf32>
    %cst_20 = arith.constant 1.500000e+00 : f32
    %56 = vector.broadcast %cst_20 : f32 to vector<128x1xf32>
    %57 = arith.addf %55, %56 : vector<128x1xf32>
    %cst_21 = arith.constant 0.000000e+00 : f32
    %58 = vector.shape_cast %2 : vector<1x32xi1> to vector<1x32xi1>
    %59 = vector.broadcast %58 : vector<1x32xi1> to vector<128x32xi1>
    %60 = vector.broadcast %cst_21 : f32 to vector<128x32xf32>
    %61 = arith.select %59, %60, %13 : vector<128x32xi1>, vector<128x32xf32>
    %62 = arith.mulf %61, %61 : vector<128x32xf32>
    %cst_22 = arith.constant dense<0.000000e+00> : vector<128xf32>
    %63 = vector.multi_reduction <add>, %62, %cst_22 [1] : vector<128x32xf32> to vector<128xf32>
    %64 = vector.shape_cast %63 : vector<128xf32> to vector<128x1xf32>
    %cst_23 = arith.constant 9.99999993E-9 : f32
    %65 = vector.broadcast %cst_23 : f32 to vector<128x1xf32>
    %66 = arith.maximumf %64, %65 : vector<128x1xf32>
    %67 = arith.mulf %57, %57 : vector<128x1xf32>
    %cst_24 = arith.constant 1.000000e+00 : f32
    %68 = vector.broadcast %cst_24 : f32 to vector<128x1xf32>
    %69 = arith.subf %67, %68 : vector<128x1xf32>
    %cst_25 = arith.constant 9.99999993E-9 : f32
    %70 = vector.broadcast %cst_25 : f32 to vector<128x1xf32>
    %71 = arith.maximumf %69, %70 : vector<128x1xf32>
    %72 = math.sqrt %71 : vector<128x1xf32>
    %73 = math.rsqrt %66 : vector<128x1xf32>
    %74 = arith.mulf %72, %73 : vector<128x1xf32>
    %75 = vector.broadcast %74 : vector<128x1xf32> to vector<128x32xf32>
    %76 = arith.mulf %13, %75 : vector<128x32xf32>
    %77 = vector.shape_cast %2 : vector<1x32xi1> to vector<1x32xi1>
    %78 = vector.broadcast %77 : vector<1x32xi1> to vector<128x32xi1>
    %79 = vector.shape_cast %57 : vector<128x1xf32> to vector<128x1xf32>
    %80 = vector.broadcast %79 : vector<128x1xf32> to vector<128x32xf32>
    %81 = arith.select %78, %80, %76 : vector<128x32xi1>, vector<128x32xf32>
    %cst_26 = arith.constant -0.353553385 : f32
    %cst_27 = arith.constant 0.353553385 : f32
    %82 = vector.broadcast %cst_26 : f32 to vector<1x32xf32>
    %83 = vector.broadcast %cst_27 : f32 to vector<1x32xf32>
    %84 = arith.select %2, %82, %83 : vector<1x32xi1>, vector<1x32xf32>
    %85 = vector.broadcast %84 : vector<1x32xf32> to vector<128x32xf32>
    %86 = arith.mulf %47, %85 : vector<128x32xf32>
    %c0_28 = arith.constant 0 : index
    %c0_29 = arith.constant 0 : index
    %87 = vector.load %arg6[%c0_28, %c0_29] : memref<128x32xf32, #tpu.memory_space<vmem>>, vector<128x32xf32>
    tpu.vector_store %arg6[%c0_28, %c0_29], %86 {strides = array<i32>} : memref<128x32xf32, #tpu.memory_space<vmem>>, vector<128x32xf32>,
    %c0_30 = arith.constant 0 : index
    %c0_31 = arith.constant 0 : index
    %88 = vector.load %arg7[%c0_30, %c0_31] : memref<128x32xf32, #tpu.memory_space<vmem>>, vector<128x32xf32>
    tpu.vector_store %arg7[%c0_30, %c0_31], %81 {strides = array<i32>} : memref<128x32xf32, #tpu.memory_space<vmem>>, vector<128x32xf32>,
    return
  }
  func.func @transform_0(%arg0: i32) -> (i32, i32) {
    %c0_i32 = arith.constant 0 : i32
    %c0_i32_0 = arith.constant 0 : i32
    return %arg0, %c0_i32 : i32, i32
  }
  func.func @transform_1(%arg0: i32) -> (i32, i32) {
    %c0_i32 = arith.constant 0 : i32
    %c0_i32_0 = arith.constant 0 : i32
    %c0_i32_1 = arith.constant 0 : i32
    return %c0_i32, %c0_i32_0 : i32, i32
  }
  func.func @transform_2(%arg0: i32) -> (i32, i32) {
    %c0_i32 = arith.constant 0 : i32
    %c0_i32_0 = arith.constant 0 : i32
    %c0_i32_1 = arith.constant 0 : i32
    return %c0_i32, %c0_i32_0 : i32, i32
  }
  func.func @transform_3(%arg0: i32) -> (i32, i32) {
    %c0_i32 = arith.constant 0 : i32
    %c0_i32_0 = arith.constant 0 : i32
    %c0_i32_1 = arith.constant 0 : i32
    return %c0_i32, %c0_i32_0 : i32, i32
  }
  func.func @transform_4(%arg0: i32) -> (i32, i32) {
    %c0_i32 = arith.constant 0 : i32
    %c0_i32_0 = arith.constant 0 : i32
    %c0_i32_1 = arith.constant 0 : i32
    return %c0_i32, %c0_i32_0 : i32, i32
  }
  func.func @transform_5(%arg0: i32) -> (i32, i32) {
    %c0_i32 = arith.constant 0 : i32
    %c0_i32_0 = arith.constant 0 : i32
    return %arg0, %c0_i32 : i32, i32
  }
  func.func @transform_6(%arg0: i32) -> (i32, i32) {
    %c0_i32 = arith.constant 0 : i32
    %c0_i32_0 = arith.constant 0 : i32
    return %arg0, %c0_i32 : i32, i32
  }
}

</mosaic_0001>

<llo_original>
// kernel: tpu_custom_call.1
$region0: #{tpu_custom_call.1}
  #allocation0 [shape = 'u32[]', space=smem, size = 0x4, offset = 0x4, fixed_abs, tag = 'smem constant byte address 0x4 - core index']
  #allocation1 [shape = 'u32[72,128]{1,0:T(1,128)}', space=vmem, size = 0x9000, scoped, tag = 'internal scratch']
  %s0 = inlined_call_operand.vmem [shape: f32[256,32], index: 0, kind: input, shape index: {}]
  %s1 = inlined_call_operand.vmem [shape: f32[32,32], index: 1, kind: input, shape index: {}]
  %s2 = inlined_call_operand.vmem [shape: f32[1,32], index: 2, kind: input, shape index: {}]
  %s3 = inlined_call_operand.vmem [shape: f32[32,32], index: 3, kind: input, shape index: {}]
  %s4 = inlined_call_operand.vmem [shape: f32[1,32], index: 4, kind: input, shape index: {}]
  %s5 = inlined_call_operand.vmem [shape: f32[256,32], index: 5, kind: output, shape index: {0}]
  %s6 = inlined_call_operand.vmem [shape: f32[256,32], index: 6, kind: output, shape index: {1}]
  %7 = xla_tuple %s5, %s6
  %s8 = sld [smem:[#allocation0]]
  $region61: #{tpu_custom_call.1} parent=0
    _
  %s10 = ssub.s32 1, %s8
  %s11 = scalar_select 0, %s10, %s8
  loop: start=0, step=1, limit=4
  $region2: #{tpu_custom_call.1} parent=0 // loop_pre_header
    _
  $region3: #{tpu_custom_call.1} parent=0 // loop_header
    %s13 = sphi 0, %s17
    %p14 = scmp.ge.s32.totalorder %s13, 4
    %s23 = sphi 0, %s25
    %s26 = sphi 0, %s23
    %s27 = sphi 0, %s26
    %s43 = sphi 0, %s27
    %s47 = sphi 0, %s47
    %s49 = sphi 0, %s47
    %s50 = sphi 0, %s49
    %s64 = sphi 0, %s50
    %s68 = sphi 0, %s68
    %s70 = sphi 0, %s68
    %s71 = sphi 0, %s70
    %s85 = sphi 0, %s71
    %s89 = sphi 0, %s89
    %s91 = sphi 0, %s89
    %s92 = sphi 0, %s91
    %s106 = sphi 0, %s92
    %s110 = sphi 0, %s110
    %s112 = sphi 0, %s110
    %s113 = sphi 0, %s112
    %s127 = sphi 0, %s113
    %s133 = sphi 0, %s135
    %s136 = sphi 0, %s133
    %s137 = sphi 0, %s136
    %s153 = sphi 0, %s137
    %s159 = sphi 0, %s161
    %s162 = sphi 0, %s159
    %s163 = sphi 0, %s162
    %s179 = sphi 0, %s163
  $region4: #{tpu_custom_call.1} parent=0 // loop_header_branch
    %16 = sbr.rel (%p14) target = $region8
  $region5: #{tpu_custom_call.1} parent=0 // loop_body
    %s18 = ssub.s32 %s13, 1
    %s19 = ssub.s32 %s13, 2
    %s20 = sadd.s32 %s13, 1
    %s21 = ssub.s32 %s13, %s20
    %p22 = scmp.eq.s32.totalorder %s21, 0
    %s24 = sadd.s32 %s23, 1
    %s25 = scalar_select %p22, %s23, %s24
    %p28 = pneg %p22
    %p29 = scmp.eq.s32.totalorder %s13, 1
    %p30 = por %p28, %p29
    %p31 = scmp.ne.s32.totalorder %s23, %s26
    %p32 = scmp.eq.s32.totalorder %s13, 0
    %p33 = por %p31, %p32
    %p34 = scmp.ne.s32.totalorder %s23, %s26
    %p35 = scmp.eq.s32.totalorder %s18, 1
    %p36 = por %p34, %p35
    %p37 = scmp.ne.s32.totalorder %s26, %s27
    %p38 = scmp.eq.s32.totalorder %s18, 0
    %p39 = por %p37, %p38
    %p40 = scmp.ne.s32.totalorder %s26, %s27
    %p41 = scmp.eq.s32.totalorder %s19, 1
    %p42 = por %p40, %p41
    %p44 = scmp.ne.s32.totalorder %s27, %s43
    %p45 = scmp.eq.s32.totalorder %s19, 0
    %p46 = por %p44, %p45
    %s48 = sadd.s32 %s47, 1
    %p51 = scmp.eq.s32.totalorder %s13, 1
    %p52 = scmp.ne.s32.totalorder %s47, %s49
    %p53 = scmp.eq.s32.totalorder %s13, 0
    %p54 = por %p52, %p53
    %p55 = scmp.ne.s32.totalorder %s47, %s49
    %p56 = scmp.eq.s32.totalorder %s18, 1
    %p57 = por %p55, %p56
    %p58 = scmp.ne.s32.totalorder %s49, %s50
    %p59 = scmp.eq.s32.totalorder %s18, 0
    %p60 = por %p58, %p59
    %p61 = scmp.ne.s32.totalorder %s49, %s50
    %p62 = scmp.eq.s32.totalorder %s19, 1
    %p63 = por %p61, %p62
    %p65 = scmp.ne.s32.totalorder %s50, %s64
    %p66 = scmp.eq.s32.totalorder %s19, 0
    %p67 = por %p65, %p66
    %s69 = sadd.s32 %s68, 1
    %p72 = scmp.eq.s32.totalorder %s13, 1
    %p73 = scmp.ne.s32.totalorder %s68, %s70
    %p74 = scmp.eq.s32.totalorder %s13, 0
    %p75 = por %p73, %p74
    %p76 = scmp.ne.s32.totalorder %s68, %s70
    %p77 = scmp.eq.s32.totalorder %s18, 1
    %p78 = por %p76, %p77
    %p79 = scmp.ne.s32.totalorder %s70, %s71
    %p80 = scmp.eq.s32.totalorder %s18, 0
    %p81 = por %p79, %p80
    %p82 = scmp.ne.s32.totalorder %s70, %s71
    %p83 = scmp.eq.s32.totalorder %s19, 1
    %p84 = por %p82, %p83
    %p86 = scmp.ne.s32.totalorder %s71, %s85
    %p87 = scmp.eq.s32.totalorder %s19, 0
    %p88 = por %p86, %p87
    %s90 = sadd.s32 %s89, 1
    %p93 = scmp.eq.s32.totalorder %s13, 1
    %p94 = scmp.ne.s32.totalorder %s89, %s91
    %p95 = scmp.eq.s32.totalorder %s13, 0
    %p96 = por %p94, %p95
    %p97 = scmp.ne.s32.totalorder %s89, %s91
    %p98 = scmp.eq.s32.totalorder %s18, 1
    %p99 = por %p97, %p98
    %p100 = scmp.ne.s32.totalorder %s91, %s92
    %p101 = scmp.eq.s32.totalorder %s18, 0
    %p102 = por %p100, %p101
    %p103 = scmp.ne.s32.totalorder %s91, %s92
    %p104 = scmp.eq.s32.totalorder %s19, 1
    %p105 = por %p103, %p104
    %p107 = scmp.ne.s32.totalorder %s92, %s106
    %p108 = scmp.eq.s32.totalorder %s19, 0
    %p109 = por %p107, %p108
    %s111 = sadd.s32 %s110, 1
    %p114 = scmp.eq.s32.totalorder %s13, 1
    %p115 = scmp.ne.s32.totalorder %s110, %s112
    %p116 = scmp.eq.s32.totalorder %s13, 0
    %p117 = por %p115, %p116
    %p118 = scmp.ne.s32.totalorder %s110, %s112
    %p119 = scmp.eq.s32.totalorder %s18, 1
    %p120 = por %p118, %p119
    %p121 = scmp.ne.s32.totalorder %s112, %s113
    %p122 = scmp.eq.s32.totalorder %s18, 0
    %p123 = por %p121, %p122
    %p124 = scmp.ne.s32.totalorder %s112, %s113
    %p125 = scmp.eq.s32.totalorder %s19, 1
    %p126 = por %p124, %p125
    %p128 = scmp.ne.s32.totalorder %s113, %s127
    %p129 = scmp.eq.s32.totalorder %s19, 0
    %p130 = por %p128, %p129
    %s131 = ssub.s32 %s13, %s20
    %p132 = scmp.eq.s32.totalorder %s131, 0
    %s134 = sadd.s32 %s133, 1
    %s135 = scalar_select %p132, %s133, %s134
    %p138 = pneg %p132
    %p139 = scmp.eq.s32.totalorder %s13, 1
    %p140 = por %p138, %p139
    %p141 = scmp.ne.s32.totalorder %s133, %s136
    %p142 = scmp.eq.s32.totalorder %s13, 0
    %p143 = por %p141, %p142
    %p144 = scmp.ne.s32.totalorder %s133, %s136
    %p145 = scmp.eq.s32.totalorder %s18, 1
    %p146 = por %p144, %p145
    %p147 = scmp.ne.s32.totalorder %s136, %s137
    %p148 = scmp.eq.s32.totalorder %s18, 0
    %p149 = por %p147, %p148
    %p150 = scmp.ne.s32.totalorder %s136, %s137
    %p151 = scmp.eq.s32.totalorder %s19, 1
    %p152 = por %p150, %p151
    %p154 = scmp.ne.s32.totalorder %s137, %s153
    %p155 = scmp.eq.s32.totalorder %s19, 0
    %p156 = por %p154, %p155
    %s157 = ssub.s32 %s13, %s20
    %p158 = scmp.eq.s32.totalorder %s157, 0
    %s160 = sadd.s32 %s159, 1
    %s161 = scalar_select %p158, %s159, %s160
    %p164 = pneg %p158
    %p165 = scmp.eq.s32.totalorder %s13, 1
    %p166 = por %p164, %p165
    %p167 = scmp.ne.s32.totalorder %s159, %s162
    %p168 = scmp.eq.s32.totalorder %s13, 0
    %p169 = por %p167, %p168
    %p170 = scmp.ne.s32.totalorder %s159, %s162
    %p171 = scmp.eq.s32.totalorder %s18, 1
    %p172 = por %p170, %p171
    %p173 = scmp.ne.s32.totalorder %s162, %s163
    %p174 = scmp.eq.s32.totalorder %s18, 0
    %p175 = por %p173, %p174
    %p176 = scmp.ne.s32.totalorder %s162, %s163
    %p177 = scmp.eq.s32.totalorder %s19, 1
    %p178 = por %p176, %p177
    %p180 = scmp.ne.s32.totalorder %s163, %s179
    %p181 = scmp.eq.s32.totalorder %s19, 0
    %p182 = por %p180, %p181
    %p183 = scmp.le.s32.totalorder 1, %s13
    %p184 = scmp.lt.s32.totalorder %s13, 3
    %p185 = pnand %p183, %p184
    %p186 = pneg %p185
    // Predicated region
    $region9: #{tpu_custom_call.1} parent=5 // pred_check
      _
    $region10: #{tpu_custom_call.1} parent=5 // pred_check_branch
      %188 = sbr.rel (%p185) target = $region12
    $region11: #{tpu_custom_call.1} parent=5 // pred_region
      %s189 = ssub.s32 %s13, 1
      // Predicated region
      $region13: #{tpu_custom_call.1} parent=11 // pred_check
        %p190 = pneg %p60
      $region14: #{tpu_custom_call.1} parent=11 // pred_check_branch
        %192 = sbr.rel (%p190) target = $region16
      $region15: #{tpu_custom_call.1} parent=11 // pred_region
        _
      $region16: #{tpu_custom_call.1} parent=11 // pred_fallthru
        _
      // Predicated region
      $region17: #{tpu_custom_call.1} parent=11 // pred_check
        %p193 = pneg %p81
      $region18: #{tpu_custom_call.1} parent=11 // pred_check_branch
        %195 = sbr.rel (%p193) target = $region20
      $region19: #{tpu_custom_call.1} parent=11 // pred_region
        _
      $region20: #{tpu_custom_call.1} parent=11 // pred_fallthru
        _
      // Predicated region
      $region21: #{tpu_custom_call.1} parent=11 // pred_check
        %p196 = pneg %p102
      $region22: #{tpu_custom_call.1} parent=11 // pred_check_branch
        %198 = sbr.rel (%p196) target = $region24
      $region23: #{tpu_custom_call.1} parent=11 // pred_region
        _
      $region24: #{tpu_custom_call.1} parent=11 // pred_fallthru
        _
      // Predicated region
      $region25: #{tpu_custom_call.1} parent=11 // pred_check
        %p199 = pneg %p123
      $region26: #{tpu_custom_call.1} parent=11 // pred_check_branch
        %201 = sbr.rel (%p199) target = $region28
      $region27: #{tpu_custom_call.1} parent=11 // pred_region
        _
      $region28: #{tpu_custom_call.1} parent=11 // pred_fallthru
        _
    $region12: #{tpu_custom_call.1} parent=5 // pred_fallthru
      _
    %p202 = scmp.lt.s32.totalorder %s13, 2
    // Predicated region
    $region29: #{tpu_custom_call.1} parent=5 // pred_check
      %p203 = pneg %p202
    $region30: #{tpu_custom_call.1} parent=5 // pred_check_branch
      %205 = sbr.rel (%p203) target = $region32
    $region31: #{tpu_custom_call.1} parent=5 // pred_region
      // Predicated region
      $region33: #{tpu_custom_call.1} parent=31 // pred_check
        %p206 = pneg %p33
      $region34: #{tpu_custom_call.1} parent=31 // pred_check_branch
        %208 = sbr.rel (%p206) target = $region36
      $region35: #{tpu_custom_call.1} parent=31 // pred_region
        %s209 = smul.u32 16, %s13
        %p210 = scmp.lt.s32.totalorder %s209, 31
        %s211 = scalar_select %p210, %s209, 31
        %s212 = smul.addr %s211, 8
        %s213 = scalar_lea.vmem %s0, %s212
        %s214 = smul.u32 16, %s13
      $region36: #{tpu_custom_call.1} parent=31 // pred_fallthru
        _
    $region32: #{tpu_custom_call.1} parent=5 // pred_fallthru
      _
    %p215 = scmp.le.s32.totalorder 1, %s13
    %p216 = scmp.lt.s32.totalorder %s13, 3
    %p217 = pnand %p215, %p216
    %p218 = pneg %p217
    // Predicated region
    $region37: #{tpu_custom_call.1} parent=5 // pred_check
      _
    $region38: #{tpu_custom_call.1} parent=5 // pred_check_branch
      %220 = sbr.rel (%p217) target = $region40
    $region39: #{tpu_custom_call.1} parent=5 // pred_region
      %s221 = ssub.s32 %s13, 1
      %s222 = smul.u32 16, %s18
      %p223 = scmp.lt.s32.totalorder %s222, 31
      %s224 = scalar_select %p223, %s222, 31
      %s225 = smul.addr %s224, 8
      %s226 = scalar_lea.vmem %s0, %s225
      %p227 = pneg %p39
      %p228 = pneg %p36
      %p229 = pneg %p60
      %p230 = pneg %p57
      %p231 = pneg %p81
      %p232 = pneg %p78
      %p233 = pneg %p102
      %p234 = pneg %p99
      %p235 = pneg %p123
      %p236 = pneg %p120
      %p237 = pneg %p149
      %p238 = pneg %p146
      %s239 = smul.u32 16, %s18
      %p240 = scmp.lt.s32.totalorder %s239, 31
      %s241 = scalar_select %p240, %s239, 31
      %s242 = smul.addr %s241, 8
      %s243 = scalar_lea.vmem %s5, %s242
      %p244 = pneg %p175
      %p245 = pneg %p172
      %s246 = smul.u32 16, %s18
      %p247 = scmp.lt.s32.totalorder %s246, 31
      %s248 = scalar_select %p247, %s246, 31
      %s249 = smul.addr %s248, 8
      %s250 = scalar_lea.vmem %s6, %s249
      %s251 = smul.u32 16, %s18
      %p252 = scmp.lt.s32.totalorder %s251, 31
      %s253 = scalar_select %p252, %s251, 31
      %s254 = smul.addr %s253, 8
      %s255 = scalar_lea.vmem %s0, %s254
      %s256 = smul.u32 16, %s18
      %s257 = smul.u32 16, %s18
      %p258 = scmp.lt.s32.totalorder %s257, 31
      %s259 = scalar_select %p258, %s257, 31
      %s260 = smul.addr %s259, 8
      %s261 = scalar_lea.vmem %s5, %s260
      %s262 = smul.u32 16, %s18
      %s263 = smul.u32 16, %s18
      %p264 = scmp.lt.s32.totalorder %s263, 31
      %s265 = scalar_select %p264, %s263, 31
      %s266 = smul.addr %s265, 8
      %s267 = scalar_lea.vmem %s6, %s266
      %s268 = smul.u32 16, %s18
      %v269 = vlaneseq
      %v270 = vand.u32 %v269, 127
      %vm271 = vcmp.eq.s32.totalorder %v270, 0
      %v272 = vld [vmem:[%s255] sm:$0xff]
      %v273 = vld [vmem:[%s255 + $0x8] sm:$0xff]
      %v274 = vld [vmem:[%s255 + $0x10] sm:$0xff]
      %v275 = vld [vmem:[%s255 + $0x18] sm:$0xff]
      %v276 = vld [vmem:[%s255 + $0x20] sm:$0xff]
      %v277 = vld [vmem:[%s255 + $0x28] sm:$0xff]
      %v278 = vld [vmem:[%s255 + $0x30] sm:$0xff]
      %v279 = vld [vmem:[%s255 + $0x38] sm:$0xff]
      %v280 = vld [vmem:[%s255 + $0x40] sm:$0xff]
      %v281 = vld [vmem:[%s255 + $0x48] sm:$0xff]
      %v282 = vld [vmem:[%s255 + $0x50] sm:$0xff]
      %v283 = vld [vmem:[%s255 + $0x58] sm:$0xff]
      %v284 = vld [vmem:[%s255 + $0x60] sm:$0xff]
      %v285 = vld [vmem:[%s255 + $0x68] sm:$0xff]
      %v286 = vld [vmem:[%s255 + $0x70] sm:$0xff]
      %v287 = vld [vmem:[%s255 + $0x78] sm:$0xff]
      %v288 = vld [vmem:[%s1] sm:$0xff]
      %v289 = vld [vmem:[%s1 + $0x8] sm:$0xff]
      %v290 = vld [vmem:[%s1 + $0x10] sm:$0xff]
      %v291 = vld [vmem:[%s1 + $0x18] sm:$0xff]
      %v292 = vld [vmem:[%s2] sm:$0x1]
      %v294 = vperm.slane %v292, 0
      %vm296 = vcmask 261120
      %v298 = vsel %vm296, %v272, 0
      %v301 = vsel %vm296, %v273, 0
      %v304 = vsel %vm296, %v274, 0
      %v307 = vsel %vm296, %v275, 0
      %v310 = vsel %vm296, %v276, 0
      %v313 = vsel %vm296, %v277, 0
      %v316 = vsel %vm296, %v278, 0
      %v319 = vsel %vm296, %v279, 0
      %v322 = vsel %vm296, %v280, 0
      %v325 = vsel %vm296, %v281, 0
      %v328 = vsel %vm296, %v282, 0
      %v331 = vsel %vm296, %v283, 0
      %v334 = vsel %vm296, %v284, 0
      %v337 = vsel %vm296, %v285, 0
      %v340 = vsel %vm296, %v286, 0
      %v343 = vsel %vm296, %v287, 0
      %345 = vmatpush.msra.mxu0 0.0
      %346 = vmatpush.msra.mxu0 0.0
      %347 = vmatpush.msra.mxu0 0.0
      %348 = vmatpush.msra.mxu0 0.0
      %349 = vmatpush.msra.mxu0 0.0
      %350 = vmatpush.msra.mxu0 0.0
      %351 = vmatpush.msra.mxu0 0.0
      %352 = vmatpush.msra.mxu0 0.0
      %353 = vmatpush.msra.mxu0 0.0
      %354 = vmatpush.msra.mxu0 0.0
      %355 = vmatpush.msra.mxu0 0.0
      %356 = vmatpush.msra.mxu0 0.0
      %357 = vmatpush.msra.mxu0 %v291
      %358 = vmatpush.msra.mxu0 %v290
      %359 = vmatpush.msra.mxu0 %v289
      %360 = vmatpush.msra.mxu0 %v288
      %361 = vmatmul.f32.gmra.mxu0 %v298
      %v362 = vpop.f32.mrf.mxu0
      %v363 = vadd.f32 %v294, %v362
      %364 = vmatmul.f32.gmra.mxu0 %v301
      %v365 = vpop.f32.mrf.mxu0
      %v366 = vadd.f32 %v294, %v365
      %367 = vmatmul.f32.gmra.mxu0 %v304
      %v368 = vpop.f32.mrf.mxu0
      %v369 = vadd.f32 %v294, %v368
      %370 = vmatmul.f32.gmra.mxu0 %v307
      %v371 = vpop.f32.mrf.mxu0
      %v372 = vadd.f32 %v294, %v371
      %373 = vmatmul.f32.gmra.mxu0 %v310
      %v374 = vpop.f32.mrf.mxu0
      %v375 = vadd.f32 %v294, %v374
      %376 = vmatmul.f32.gmra.mxu0 %v313
      %v377 = vpop.f32.mrf.mxu0
      %v378 = vadd.f32 %v294, %v377
      %379 = vmatmul.f32.gmra.mxu0 %v316
      %v380 = vpop.f32.mrf.mxu0
      %v381 = vadd.f32 %v294, %v380
      %382 = vmatmul.f32.gmra.mxu0 %v319
      %v383 = vpop.f32.mrf.mxu0
      %v384 = vadd.f32 %v294, %v383
      %385 = vmatmul.f32.gmra.mxu0 %v322
      %v386 = vpop.f32.mrf.mxu0
      %v387 = vadd.f32 %v294, %v386
      %388 = vmatmul.f32.gmra.mxu0 %v325
      %v389 = vpop.f32.mrf.mxu0
      %v390 = vadd.f32 %v294, %v389
      %391 = vmatmul.f32.gmra.mxu0 %v328
      %v392 = vpop.f32.mrf.mxu0
      %v393 = vadd.f32 %v294, %v392
      %394 = vmatmul.f32.gmra.mxu0 %v331
      %v395 = vpop.f32.mrf.mxu0
      %v396 = vadd.f32 %v294, %v395
      %397 = vmatmul.f32.gmra.mxu0 %v334
      %v398 = vpop.f32.mrf.mxu0
      %v399 = vadd.f32 %v294, %v398
      %400 = vmatmul.f32.gmra.mxu0 %v337
      %v401 = vpop.f32.mrf.mxu0
      %v402 = vadd.f32 %v294, %v401
      %403 = vmatmul.f32.gmra.mxu0 %v340
      %v404 = vpop.f32.mrf.mxu0
      %v405 = vadd.f32 %v294, %v404
      %406 = vmatmul.f32.gmra.mxu0 %v343
      %v407 = vpop.f32.mrf.mxu0
      %v408 = vadd.f32 %v294, %v407
      %409 = vdwg.mxu0
      %v410 = vld [vmem:[%s3] sm:$0xff]
      %v411 = vld [vmem:[%s3 + $0x8] sm:$0xff]
      %v412 = vld [vmem:[%s3 + $0x10] sm:$0xff]
      %v413 = vld [vmem:[%s3 + $0x18] sm:$0xff]
      %v414 = vld [vmem:[%s4] sm:$0x1]
      %v416 = vperm.slane %v414, 0
      %418 = vmatpush.msra.mxu0 0.0
      %419 = vmatpush.msra.mxu0 0.0
      %420 = vmatpush.msra.mxu0 0.0
      %421 = vmatpush.msra.mxu0 0.0
      %422 = vmatpush.msra.mxu0 0.0
      %423 = vmatpush.msra.mxu0 0.0
      %424 = vmatpush.msra.mxu0 0.0
      %425 = vmatpush.msra.mxu0 0.0
      %426 = vmatpush.msra.mxu0 0.0
      %427 = vmatpush.msra.mxu0 0.0
      %428 = vmatpush.msra.mxu0 0.0
      %429 = vmatpush.msra.mxu0 0.0
      %430 = vmatpush.msra.mxu0 %v413
      %431 = vmatpush.msra.mxu0 %v412
      %432 = vmatpush.msra.mxu0 %v411
      %433 = vmatpush.msra.mxu0 %v410
      %434 = vmatmul.f32.gmra.mxu0 %v298
      %v435 = vpop.f32.mrf.mxu0
      %v436 = vadd.f32 %v416, %v435
      %437 = vmatmul.f32.gmra.mxu0 %v301
      %v438 = vpop.f32.mrf.mxu0
      %v439 = vadd.f32 %v416, %v438
      %440 = vmatmul.f32.gmra.mxu0 %v304
      %v441 = vpop.f32.mrf.mxu0
      %v442 = vadd.f32 %v416, %v441
      %443 = vmatmul.f32.gmra.mxu0 %v307
      %v444 = vpop.f32.mrf.mxu0
      %v445 = vadd.f32 %v416, %v444
      %446 = vmatmul.f32.gmra.mxu0 %v310
      %v447 = vpop.f32.mrf.mxu0
      %v448 = vadd.f32 %v416, %v447
      %449 = vmatmul.f32.gmra.mxu0 %v313
      %v450 = vpop.f32.mrf.mxu0
      %v451 = vadd.f32 %v416, %v450
      %452 = vmatmul.f32.gmra.mxu0 %v316
      %v453 = vpop.f32.mrf.mxu0
      %v454 = vadd.f32 %v416, %v453
      %455 = vmatmul.f32.gmra.mxu0 %v319
      %v456 = vpop.f32.mrf.mxu0
      %v457 = vadd.f32 %v416, %v456
      %458 = vmatmul.f32.gmra.mxu0 %v322
      %v459 = vpop.f32.mrf.mxu0
      %v460 = vadd.f32 %v416, %v459
      %461 = vmatmul.f32.gmra.mxu0 %v325
      %v462 = vpop.f32.mrf.mxu0
      %v463 = vadd.f32 %v416, %v462
      %464 = vmatmul.f32.gmra.mxu0 %v328
      %v465 = vpop.f32.mrf.mxu0
      %v466 = vadd.f32 %v416, %v465
      %467 = vmatmul.f32.gmra.mxu0 %v331
      %v468 = vpop.f32.mrf.mxu0
      %v469 = vadd.f32 %v416, %v468
      %470 = vmatmul.f32.gmra.mxu0 %v334
      %v471 = vpop.f32.mrf.mxu0
      %v472 = vadd.f32 %v416, %v471
      %473 = vmatmul.f32.gmra.mxu0 %v337
      %v474 = vpop.f32.mrf.mxu0
      %v475 = vadd.f32 %v416, %v474
      %476 = vmatmul.f32.gmra.mxu0 %v340
      %v477 = vpop.f32.mrf.mxu0
      %v478 = vadd.f32 %v416, %v477
      %479 = vmatmul.f32.gmra.mxu0 %v343
      %v480 = vpop.f32.mrf.mxu0
      %v481 = vadd.f32 %v416, %v480
      %482 = vdwg.mxu0
      %v483 = vxor.u32 %v363, 2147483648
      %v484 = vxor.u32 %v366, 2147483648
      %v485 = vxor.u32 %v369, 2147483648
      %v486 = vxor.u32 %v372, 2147483648
      %v487 = vxor.u32 %v375, 2147483648
      %v488 = vxor.u32 %v378, 2147483648
      %v489 = vxor.u32 %v381, 2147483648
      %v490 = vxor.u32 %v384, 2147483648
      %v491 = vxor.u32 %v387, 2147483648
      %v492 = vxor.u32 %v390, 2147483648
      %v493 = vxor.u32 %v393, 2147483648
      %v494 = vxor.u32 %v396, 2147483648
      %v495 = vxor.u32 %v399, 2147483648
      %v496 = vxor.u32 %v402, 2147483648
      %v497 = vxor.u32 %v405, 2147483648
      %v498 = vxor.u32 %v408, 2147483648
      %v499 = vmul.f32 %v483, 1.442695
      %v500 = vpow.pop %v499
      %v501 = vmul.f32 %v484, 1.442695
      %v502 = vpow.pop %v501
      %v503 = vmul.f32 %v485, 1.442695
      %v504 = vpow.pop %v503
      %v505 = vmul.f32 %v486, 1.442695
      %v506 = vpow.pop %v505
      %v507 = vmul.f32 %v487, 1.442695
      %v508 = vpow.pop %v507
      %v509 = vmul.f32 %v488, 1.442695
      %v510 = vpow.pop %v509
      %v511 = vmul.f32 %v489, 1.442695
      %v512 = vpow.pop %v511
      %v513 = vmul.f32 %v490, 1.442695
      %v514 = vpow.pop %v513
      %v515 = vmul.f32 %v491, 1.442695
      %v516 = vpow.pop %v515
      %v517 = vmul.f32 %v492, 1.442695
      %v518 = vpow.pop %v517
      %v519 = vmul.f32 %v493, 1.442695
      %v520 = vpow.pop %v519
      %v521 = vmul.f32 %v494, 1.442695
      %v522 = vpow.pop %v521
      %v523 = vmul.f32 %v495, 1.442695
      %v524 = vpow.pop %v523
      %v525 = vmul.f32 %v496, 1.442695
      %v526 = vpow.pop %v525
      %v527 = vmul.f32 %v497, 1.442695
      %v528 = vpow.pop %v527
      %v529 = vmul.f32 %v498, 1.442695
      %v530 = vpow.pop %v529
      %v531 = vadd.f32 %v500, 1.0
      %v532 = vadd.f32 %v502, 1.0
      %v533 = vadd.f32 %v504, 1.0
      %v534 = vadd.f32 %v506, 1.0
      %v535 = vadd.f32 %v508, 1.0
      %v536 = vadd.f32 %v510, 1.0
      %v537 = vadd.f32 %v512, 1.0
      %v538 = vadd.f32 %v514, 1.0
      %v539 = vadd.f32 %v516, 1.0
      %v540 = vadd.f32 %v518, 1.0
      %v541 = vadd.f32 %v520, 1.0
      %v542 = vadd.f32 %v522, 1.0
      %v543 = vadd.f32 %v524, 1.0
      %v544 = vadd.f32 %v526, 1.0
      %v545 = vadd.f32 %v528, 1.0
      %v546 = vadd.f32 %v530, 1.0
      %v547 = vrcp.pop %v531
      %v548 = vmul.f32 %v531, %v547
      %v549 = vsub.f32 1.0, %v548
      %v550 = vmul.f32 %v547, %v549
      %v551 = vadd.f32 %v547, %v550
      %vm552 = vweird.f32 %v531
      %vm553 = vweird.f32 %v547
      %vm554 = vmor %vm552, %vm553
      %v555 = vsel %vm554, %v547, %v551
      %v556 = vand.u32 2147483647, %v531
      %vm557 = vcmp.eq.f32.partialorder %v556, 8.507059e+37
      %v558 = vand.u32 %v531, 2147483648
      %v559 = vor.u32 1.1754944e-38, %v558
      %v560 = vsel %vm557, %v559, %v555
      %v561 = vmul.f32 1.0, %v560
      %v562 = vrcp.pop %v532
      %v563 = vmul.f32 %v532, %v562
      %v564 = vsub.f32 1.0, %v563
      %v565 = vmul.f32 %v562, %v564
      %v566 = vadd.f32 %v562, %v565
      %vm567 = vweird.f32 %v532
      %vm568 = vweird.f32 %v562
      %vm569 = vmor %vm567, %vm568
      %v570 = vsel %vm569, %v562, %v566
      %v571 = vand.u32 2147483647, %v532
      %vm572 = vcmp.eq.f32.partialorder %v571, 8.507059e+37
      %v573 = vand.u32 %v532, 2147483648
      %v574 = vor.u32 1.1754944e-38, %v573
      %v575 = vsel %vm572, %v574, %v570
      %v576 = vmul.f32 1.0, %v575
      %v577 = vrcp.pop %v533
      %v578 = vmul.f32 %v533, %v577
      %v579 = vsub.f32 1.0, %v578
      %v580 = vmul.f32 %v577, %v579
      %v581 = vadd.f32 %v577, %v580
      %vm582 = vweird.f32 %v533
      %vm583 = vweird.f32 %v577
      %vm584 = vmor %vm582, %vm583
      %v585 = vsel %vm584, %v577, %v581
      %v586 = vand.u32 2147483647, %v533
      %vm587 = vcmp.eq.f32.partialorder %v586, 8.507059e+37
      %v588 = vand.u32 %v533, 2147483648
      %v589 = vor.u32 1.1754944e-38, %v588
      %v590 = vsel %vm587, %v589, %v585
      %v591 = vmul.f32 1.0, %v590
      %v592 = vrcp.pop %v534
      %v593 = vmul.f32 %v534, %v592
      %v594 = vsub.f32 1.0, %v593
      %v595 = vmul.f32 %v592, %v594
      %v596 = vadd.f32 %v592, %v595
      %vm597 = vweird.f32 %v534
      %vm598 = vweird.f32 %v592
      %vm599 = vmor %vm597, %vm598
      %v600 = vsel %vm599, %v592, %v596
      %v601 = vand.u32 2147483647, %v534
      %vm602 = vcmp.eq.f32.partialorder %v601, 8.507059e+37
      %v603 = vand.u32 %v534, 2147483648
      %v604 = vor.u32 1.1754944e-38, %v603
      %v605 = vsel %vm602, %v604, %v600
      %v606 = vmul.f32 1.0, %v605
      %v607 = vrcp.pop %v535
      %v608 = vmul.f32 %v535, %v607
      %v609 = vsub.f32 1.0, %v608
      %v610 = vmul.f32 %v607, %v609
      %v611 = vadd.f32 %v607, %v610
      %vm612 = vweird.f32 %v535
      %vm613 = vweird.f32 %v607
      %vm614 = vmor %vm612, %vm613
      %v615 = vsel %vm614, %v607, %v611
      %v616 = vand.u32 2147483647, %v535
      %vm617 = vcmp.eq.f32.partialorder %v616, 8.507059e+37
      %v618 = vand.u32 %v535, 2147483648
      %v619 = vor.u32 1.1754944e-38, %v618
      %v620 = vsel %vm617, %v619, %v615
      %v621 = vmul.f32 1.0, %v620
      %v622 = vrcp.pop %v536
      %v623 = vmul.f32 %v536, %v622
      %v624 = vsub.f32 1.0, %v623
      %v625 = vmul.f32 %v622, %v624
      %v626 = vadd.f32 %v622, %v625
      %vm627 = vweird.f32 %v536
      %vm628 = vweird.f32 %v622
      %vm629 = vmor %vm627, %vm628
      %v630 = vsel %vm629, %v622, %v626
      %v631 = vand.u32 2147483647, %v536
      %vm632 = vcmp.eq.f32.partialorder %v631, 8.507059e+37
      %v633 = vand.u32 %v536, 2147483648
      %v634 = vor.u32 1.1754944e-38, %v633
      %v635 = vsel %vm632, %v634, %v630
      %v636 = vmul.f32 1.0, %v635
      %v637 = vrcp.pop %v537
      %v638 = vmul.f32 %v537, %v637
      %v639 = vsub.f32 1.0, %v638
      %v640 = vmul.f32 %v637, %v639
      %v641 = vadd.f32 %v637, %v640
      %vm642 = vweird.f32 %v537
      %vm643 = vweird.f32 %v637
      %vm644 = vmor %vm642, %vm643
      %v645 = vsel %vm644, %v637, %v641
      %v646 = vand.u32 2147483647, %v537
      %vm647 = vcmp.eq.f32.partialorder %v646, 8.507059e+37
      %v648 = vand.u32 %v537, 2147483648
      %v649 = vor.u32 1.1754944e-38, %v648
      %v650 = vsel %vm647, %v649, %v645
      %v651 = vmul.f32 1.0, %v650
      %v652 = vrcp.pop %v538
      %v653 = vmul.f32 %v538, %v652
      %v654 = vsub.f32 1.0, %v653
      %v655 = vmul.f32 %v652, %v654
      %v656 = vadd.f32 %v652, %v655
      %vm657 = vweird.f32 %v538
      %vm658 = vweird.f32 %v652
      %vm659 = vmor %vm657, %vm658
      %v660 = vsel %vm659, %v652, %v656
      %v661 = vand.u32 2147483647, %v538
      %vm662 = vcmp.eq.f32.partialorder %v661, 8.507059e+37
      %v663 = vand.u32 %v538, 2147483648
      %v664 = vor.u32 1.1754944e-38, %v663
      %v665 = vsel %vm662, %v664, %v660
      %v666 = vmul.f32 1.0, %v665
      %v667 = vrcp.pop %v539
      %v668 = vmul.f32 %v539, %v667
      %v669 = vsub.f32 1.0, %v668
      %v670 = vmul.f32 %v667, %v669
      %v671 = vadd.f32 %v667, %v670
      %vm672 = vweird.f32 %v539
      %vm673 = vweird.f32 %v667
      %vm674 = vmor %vm672, %vm673
      %v675 = vsel %vm674, %v667, %v671
      %v676 = vand.u32 2147483647, %v539
      %vm677 = vcmp.eq.f32.partialorder %v676, 8.507059e+37
      %v678 = vand.u32 %v539, 2147483648
      %v679 = vor.u32 1.1754944e-38, %v678
      %v680 = vsel %vm677, %v679, %v675
      %v681 = vmul.f32 1.0, %v680
      %v682 = vrcp.pop %v540
      %v683 = vmul.f32 %v540, %v682
      %v684 = vsub.f32 1.0, %v683
      %v685 = vmul.f32 %v682, %v684
      %v686 = vadd.f32 %v682, %v685
      %vm687 = vweird.f32 %v540
      %vm688 = vweird.f32 %v682
      %vm689 = vmor %vm687, %vm688
      %v690 = vsel %vm689, %v682, %v686
      %v691 = vand.u32 2147483647, %v540
      %vm692 = vcmp.eq.f32.partialorder %v691, 8.507059e+37
      %v693 = vand.u32 %v540, 2147483648
      %v694 = vor.u32 1.1754944e-38, %v693
      %v695 = vsel %vm692, %v694, %v690
      %v696 = vmul.f32 1.0, %v695
      %v697 = vrcp.pop %v541
      %v698 = vmul.f32 %v541, %v697
      %v699 = vsub.f32 1.0, %v698
      %v700 = vmul.f32 %v697, %v699
      %v701 = vadd.f32 %v697, %v700
      %vm702 = vweird.f32 %v541
      %vm703 = vweird.f32 %v697
      %vm704 = vmor %vm702, %vm703
      %v705 = vsel %vm704, %v697, %v701
      %v706 = vand.u32 2147483647, %v541
      %vm707 = vcmp.eq.f32.partialorder %v706, 8.507059e+37
      %v708 = vand.u32 %v541, 2147483648
      %v709 = vor.u32 1.1754944e-38, %v708
      %v710 = vsel %vm707, %v709, %v705
      %v711 = vmul.f32 1.0, %v710
      %v712 = vrcp.pop %v542
      %v713 = vmul.f32 %v542, %v712
      %v714 = vsub.f32 1.0, %v713
      %v715 = vmul.f32 %v712, %v714
      %v716 = vadd.f32 %v712, %v715
      %vm717 = vweird.f32 %v542
      %vm718 = vweird.f32 %v712
      %vm719 = vmor %vm717, %vm718
      %v720 = vsel %vm719, %v712, %v716
      %v721 = vand.u32 2147483647, %v542
      %vm722 = vcmp.eq.f32.partialorder %v721, 8.507059e+37
      %v723 = vand.u32 %v542, 2147483648
      %v724 = vor.u32 1.1754944e-38, %v723
      %v725 = vsel %vm722, %v724, %v720
      %v726 = vmul.f32 1.0, %v725
      %v727 = vrcp.pop %v543
      %v728 = vmul.f32 %v543, %v727
      %v729 = vsub.f32 1.0, %v728
      %v730 = vmul.f32 %v727, %v729
      %v731 = vadd.f32 %v727, %v730
      %vm732 = vweird.f32 %v543
      %vm733 = vweird.f32 %v727
      %vm734 = vmor %vm732, %vm733
      %v735 = vsel %vm734, %v727, %v731
      %v736 = vand.u32 2147483647, %v543
      %vm737 = vcmp.eq.f32.partialorder %v736, 8.507059e+37
      %v738 = vand.u32 %v543, 2147483648
      %v739 = vor.u32 1.1754944e-38, %v738
      %v740 = vsel %vm737, %v739, %v735
      %v741 = vmul.f32 1.0, %v740
      %v742 = vrcp.pop %v544
      %v743 = vmul.f32 %v544, %v742
      %v744 = vsub.f32 1.0, %v743
      %v745 = vmul.f32 %v742, %v744
      %v746 = vadd.f32 %v742, %v745
      %vm747 = vweird.f32 %v544
      %vm748 = vweird.f32 %v742
      %vm749 = vmor %vm747, %vm748
      %v750 = vsel %vm749, %v742, %v746
      %v751 = vand.u32 2147483647, %v544
      %vm752 = vcmp.eq.f32.partialorder %v751, 8.507059e+37
      %v753 = vand.u32 %v544, 2147483648
      %v754 = vor.u32 1.1754944e-38, %v753
      %v755 = vsel %vm752, %v754, %v750
      %v756 = vmul.f32 1.0, %v755
      %v757 = vrcp.pop %v545
      %v758 = vmul.f32 %v545, %v757
      %v759 = vsub.f32 1.0, %v758
      %v760 = vmul.f32 %v757, %v759
      %v761 = vadd.f32 %v757, %v760
      %vm762 = vweird.f32 %v545
      %vm763 = vweird.f32 %v757
      %vm764 = vmor %vm762, %vm763
      %v765 = vsel %vm764, %v757, %v761
      %v766 = vand.u32 2147483647, %v545
      %vm767 = vcmp.eq.f32.partialorder %v766, 8.507059e+37
      %v768 = vand.u32 %v545, 2147483648
      %v769 = vor.u32 1.1754944e-38, %v768
      %v770 = vsel %vm767, %v769, %v765
      %v771 = vmul.f32 1.0, %v770
      %v772 = vrcp.pop %v546
      %v773 = vmul.f32 %v546, %v772
      %v774 = vsub.f32 1.0, %v773
      %v775 = vmul.f32 %v772, %v774
      %v776 = vadd.f32 %v772, %v775
      %vm777 = vweird.f32 %v546
      %vm778 = vweird.f32 %v772
      %vm779 = vmor %vm777, %vm778
      %v780 = vsel %vm779, %v772, %v776
      %v781 = vand.u32 2147483647, %v546
      %vm782 = vcmp.eq.f32.partialorder %v781, 8.507059e+37
      %v783 = vand.u32 %v546, 2147483648
      %v784 = vor.u32 1.1754944e-38, %v783
      %v785 = vsel %vm782, %v784, %v780
      %v786 = vmul.f32 1.0, %v785
      %v787 = vmul.f32 %v561, 10.0
      %v788 = vmul.f32 %v576, 10.0
      %v789 = vmul.f32 %v591, 10.0
      %v790 = vmul.f32 %v606, 10.0
      %v791 = vmul.f32 %v621, 10.0
      %v792 = vmul.f32 %v636, 10.0
      %v793 = vmul.f32 %v651, 10.0
      %v794 = vmul.f32 %v666, 10.0
      %v795 = vmul.f32 %v681, 10.0
      %v796 = vmul.f32 %v696, 10.0
      %v797 = vmul.f32 %v711, 10.0
      %v798 = vmul.f32 %v726, 10.0
      %v799 = vmul.f32 %v741, 10.0
      %v800 = vmul.f32 %v756, 10.0
      %v801 = vmul.f32 %v771, 10.0
      %v802 = vmul.f32 %v786, 10.0
      %v803 = vadd.f32 %v787, 1.5
      %v804 = vadd.f32 %v788, 1.5
      %v805 = vadd.f32 %v789, 1.5
      %v806 = vadd.f32 %v790, 1.5
      %v807 = vadd.f32 %v791, 1.5
      %v808 = vadd.f32 %v792, 1.5
      %v809 = vadd.f32 %v793, 1.5
      %v810 = vadd.f32 %v794, 1.5
      %v811 = vadd.f32 %v795, 1.5
      %v812 = vadd.f32 %v796, 1.5
      %v813 = vadd.f32 %v797, 1.5
      %v814 = vadd.f32 %v798, 1.5
      %v815 = vadd.f32 %v799, 1.5
      %v816 = vadd.f32 %v800, 1.5
      %v817 = vadd.f32 %v801, 1.5
      %v818 = vadd.f32 %v802, 1.5
      %v819 = vsel %vm271, 1, 0
      %vm820 = vcmp.eq.s32.totalorder %v819, 1
      %v821 = vsel %vm820, 0.0, %v363
      %v822 = vsel %vm820, 0.0, %v366
      %v823 = vsel %vm820, 0.0, %v369
      %v824 = vsel %vm820, 0.0, %v372
      %v825 = vsel %vm820, 0.0, %v375
      %v826 = vsel %vm820, 0.0, %v378
      %v827 = vsel %vm820, 0.0, %v381
      %v828 = vsel %vm820, 0.0, %v384
      %v829 = vsel %vm820, 0.0, %v387
      %v830 = vsel %vm820, 0.0, %v390
      %v831 = vsel %vm820, 0.0, %v393
      %v832 = vsel %vm820, 0.0, %v396
      %v833 = vsel %vm820, 0.0, %v399
      %v834 = vsel %vm820, 0.0, %v402
      %v835 = vsel %vm820, 0.0, %v405
      %v836 = vsel %vm820, 0.0, %v408
      %v837 = vmul.f32 %v821, %v821
      %v838 = vmul.f32 %v822, %v822
      %v839 = vmul.f32 %v823, %v823
      %v840 = vmul.f32 %v824, %v824
      %v841 = vmul.f32 %v825, %v825
      %v842 = vmul.f32 %v826, %v826
      %v843 = vmul.f32 %v827, %v827
      %v844 = vmul.f32 %v828, %v828
      %v845 = vmul.f32 %v829, %v829
      %v846 = vmul.f32 %v830, %v830
      %v847 = vmul.f32 %v831, %v831
      %v848 = vmul.f32 %v832, %v832
      %v849 = vmul.f32 %v833, %v833
      %v850 = vmul.f32 %v834, %v834
      %v851 = vmul.f32 %v835, %v835
      %v852 = vmul.f32 %v836, %v836
      %v853 = vsel %vm296, %v837, 0.0
      %854 = vadd.xlane.f32.xlu0 %v853
      %v855 = vpop.xlane.xlu0 %854
      %v856 = vsel %vm296, %v838, 0.0
      %857 = vadd.xlane.f32.xlu0 %v856
      %v858 = vpop.xlane.xlu0 %857
      %v859 = vsel %vm296, %v839, 0.0
      %860 = vadd.xlane.f32.xlu0 %v859
      %v861 = vpop.xlane.xlu0 %860
      %v862 = vsel %vm296, %v840, 0.0
      %863 = vadd.xlane.f32.xlu0 %v862
      %v864 = vpop.xlane.xlu0 %863
      %v865 = vsel %vm296, %v841, 0.0
      %866 = vadd.xlane.f32.xlu0 %v865
      %v867 = vpop.xlane.xlu0 %866
      %v868 = vsel %vm296, %v842, 0.0
      %869 = vadd.xlane.f32.xlu0 %v868
      %v870 = vpop.xlane.xlu0 %869
      %v871 = vsel %vm296, %v843, 0.0
      %872 = vadd.xlane.f32.xlu0 %v871
      %v873 = vpop.xlane.xlu0 %872
      %v874 = vsel %vm296, %v844, 0.0
      %875 = vadd.xlane.f32.xlu0 %v874
      %v876 = vpop.xlane.xlu0 %875
      %v877 = vsel %vm296, %v845, 0.0
      %878 = vadd.xlane.f32.xlu0 %v877
      %v879 = vpop.xlane.xlu0 %878
      %v880 = vsel %vm296, %v846, 0.0
      %881 = vadd.xlane.f32.xlu0 %v880
      %v882 = vpop.xlane.xlu0 %881
      %v883 = vsel %vm296, %v847, 0.0
      %884 = vadd.xlane.f32.xlu0 %v883
      %v885 = vpop.xlane.xlu0 %884
      %v886 = vsel %vm296, %v848, 0.0
      %887 = vadd.xlane.f32.xlu0 %v886
      %v888 = vpop.xlane.xlu0 %887
      %v889 = vsel %vm296, %v849, 0.0
      %890 = vadd.xlane.f32.xlu0 %v889
      %v891 = vpop.xlane.xlu0 %890
      %v892 = vsel %vm296, %v850, 0.0
      %893 = vadd.xlane.f32.xlu0 %v892
      %v894 = vpop.xlane.xlu0 %893
      %v895 = vsel %vm296, %v851, 0.0
      %896 = vadd.xlane.f32.xlu0 %v895
      %v897 = vpop.xlane.xlu0 %896
      %v898 = vsel %vm296, %v852, 0.0
      %899 = vadd.xlane.f32.xlu0 %v898
      %v900 = vpop.xlane.xlu0 %899
      %v901 = vmax.f32 %v855, 1e-08
      %v902 = vmax.f32 %v858, 1e-08
      %v903 = vmax.f32 %v861, 1e-08
      %v904 = vmax.f32 %v864, 1e-08
      %v905 = vmax.f32 %v867, 1e-08
      %v906 = vmax.f32 %v870, 1e-08
      %v907 = vmax.f32 %v873, 1e-08
      %v908 = vmax.f32 %v876, 1e-08
      %v909 = vmax.f32 %v879, 1e-08
      %v910 = vmax.f32 %v882, 1e-08
      %v911 = vmax.f32 %v885, 1e-08
      %v912 = vmax.f32 %v888, 1e-08
      %v913 = vmax.f32 %v891, 1e-08
      %v914 = vmax.f32 %v894, 1e-08
      %v915 = vmax.f32 %v897, 1e-08
      %v916 = vmax.f32 %v900, 1e-08
      %v917 = vmul.f32 %v803, %v803
      %v918 = vmul.f32 %v804, %v804
      %v919 = vmul.f32 %v805, %v805
      %v920 = vmul.f32 %v806, %v806
      %v921 = vmul.f32 %v807, %v807
      %v922 = vmul.f32 %v808, %v808
      %v923 = vmul.f32 %v809, %v809
      %v924 = vmul.f32 %v810, %v810
      %v925 = vmul.f32 %v811, %v811
      %v926 = vmul.f32 %v812, %v812
      %v927 = vmul.f32 %v813, %v813
      %v928 = vmul.f32 %v814, %v814
      %v929 = vmul.f32 %v815, %v815
      %v930 = vmul.f32 %v816, %v816
      %v931 = vmul.f32 %v817, %v817
      %v932 = vmul.f32 %v818, %v818
      %v933 = vsub.f32 %v917, 1.0
      %v934 = vsub.f32 %v918, 1.0
      %v935 = vsub.f32 %v919, 1.0
      %v936 = vsub.f32 %v920, 1.0
      %v937 = vsub.f32 %v921, 1.0
      %v938 = vsub.f32 %v922, 1.0
      %v939 = vsub.f32 %v923, 1.0
      %v940 = vsub.f32 %v924, 1.0
      %v941 = vsub.f32 %v925, 1.0
      %v942 = vsub.f32 %v926, 1.0
      %v943 = vsub.f32 %v927, 1.0
      %v944 = vsub.f32 %v928, 1.0
      %v945 = vsub.f32 %v929, 1.0
      %v946 = vsub.f32 %v930, 1.0
      %v947 = vsub.f32 %v931, 1.0
      %v948 = vsub.f32 %v932, 1.0
      %v949 = vmax.f32 %v933, 1e-08
      %v950 = vmax.f32 %v934, 1e-08
      %v951 = vmax.f32 %v935, 1e-08
      %v952 = vmax.f32 %v936, 1e-08
      %v953 = vmax.f32 %v937, 1e-08
      %v954 = vmax.f32 %v938, 1e-08
      %v955 = vmax.f32 %v939, 1e-08
      %v956 = vmax.f32 %v940, 1e-08
      %v957 = vmax.f32 %v941, 1e-08
      %v958 = vmax.f32 %v942, 1e-08
      %v959 = vmax.f32 %v943, 1e-08
      %v960 = vmax.f32 %v944, 1e-08
      %v961 = vmax.f32 %v945, 1e-08
      %v962 = vmax.f32 %v946, 1e-08
      %v963 = vmax.f32 %v947, 1e-08
      %v964 = vmax.f32 %v948, 1e-08
      %v965 = vrsqrt.pop %v949
      %v966 = vmul.f32 %v965, %v949
      %v967 = vmul.f32 %v966, %v965
      %v968 = vmul.f32 0.5, %v967
      %v969 = vsub.f32 1.5, %v968
      %v970 = vmul.f32 %v965, %v969
      %v971 = vmul.f32 %v949, %v970
      %vm972 = vcmp.eq.f32.partialorder %v949, inf
      %v973 = vsel %vm972, %v949, %v971
      %vm974 = vcmp.eq.f32.partialorder %v949, 0.0
      %v975 = vand.u32 %v949, 2147483648
      %v976 = vsel %vm974, %v975, %v973
      %v977 = vrsqrt.pop %v950
      %v978 = vmul.f32 %v977, %v950
      %v979 = vmul.f32 %v978, %v977
      %v980 = vmul.f32 0.5, %v979
      %v981 = vsub.f32 1.5, %v980
      %v982 = vmul.f32 %v977, %v981
      %v983 = vmul.f32 %v950, %v982
      %vm984 = vcmp.eq.f32.partialorder %v950, inf
      %v985 = vsel %vm984, %v950, %v983
      %vm986 = vcmp.eq.f32.partialorder %v950, 0.0
      %v987 = vand.u32 %v950, 2147483648
      %v988 = vsel %vm986, %v987, %v985
      %v989 = vrsqrt.pop %v951
      %v990 = vmul.f32 %v989, %v951
      %v991 = vmul.f32 %v990, %v989
      %v992 = vmul.f32 0.5, %v991
      %v993 = vsub.f32 1.5, %v992
      %v994 = vmul.f32 %v989, %v993
      %v995 = vmul.f32 %v951, %v994
      %vm996 = vcmp.eq.f32.partialorder %v951, inf
      %v997 = vsel %vm996, %v951, %v995
      %vm998 = vcmp.eq.f32.partialorder %v951, 0.0
      %v999 = vand.u32 %v951, 2147483648
      %v1000 = vsel %vm998, %v999, %v997
      %v1001 = vrsqrt.pop %v952
      %v1002 = vmul.f32 %v1001, %v952
      %v1003 = vmul.f32 %v1002, %v1001
      %v1004 = vmul.f32 0.5, %v1003
      %v1005 = vsub.f32 1.5, %v1004
      %v1006 = vmul.f32 %v1001, %v1005
      %v1007 = vmul.f32 %v952, %v1006
      %vm1008 = vcmp.eq.f32.partialorder %v952, inf
      %v1009 = vsel %vm1008, %v952, %v1007
      %vm1010 = vcmp.eq.f32.partialorder %v952, 0.0
      %v1011 = vand.u32 %v952, 2147483648
      %v1012 = vsel %vm1010, %v1011, %v1009
      %v1013 = vrsqrt.pop %v953
      %v1014 = vmul.f32 %v1013, %v953
      %v1015 = vmul.f32 %v1014, %v1013
      %v1016 = vmul.f32 0.5, %v1015
      %v1017 = vsub.f32 1.5, %v1016
      %v1018 = vmul.f32 %v1013, %v1017
      %v1019 = vmul.f32 %v953, %v1018
      %vm1020 = vcmp.eq.f32.partialorder %v953, inf
      %v1021 = vsel %vm1020, %v953, %v1019
      %vm1022 = vcmp.eq.f32.partialorder %v953, 0.0
      %v1023 = vand.u32 %v953, 2147483648
      %v1024 = vsel %vm1022, %v1023, %v1021
      %v1025 = vrsqrt.pop %v954
      %v1026 = vmul.f32 %v1025, %v954
      %v1027 = vmul.f32 %v1026, %v1025
      %v1028 = vmul.f32 0.5, %v1027
      %v1029 = vsub.f32 1.5, %v1028
      %v1030 = vmul.f32 %v1025, %v1029
      %v1031 = vmul.f32 %v954, %v1030
      %vm1032 = vcmp.eq.f32.partialorder %v954, inf
      %v1033 = vsel %vm1032, %v954, %v1031
      %vm1034 = vcmp.eq.f32.partialorder %v954, 0.0
      %v1035 = vand.u32 %v954, 2147483648
      %v1036 = vsel %vm1034, %v1035, %v1033
      %v1037 = vrsqrt.pop %v955
      %v1038 = vmul.f32 %v1037, %v955
      %v1039 = vmul.f32 %v1038, %v1037
      %v1040 = vmul.f32 0.5, %v1039
      %v1041 = vsub.f32 1.5, %v1040
      %v1042 = vmul.f32 %v1037, %v1041
      %v1043 = vmul.f32 %v955, %v1042
      %vm1044 = vcmp.eq.f32.partialorder %v955, inf
      %v1045 = vsel %vm1044, %v955, %v1043
      %vm1046 = vcmp.eq.f32.partialorder %v955, 0.0
      %v1047 = vand.u32 %v955, 2147483648
      %v1048 = vsel %vm1046, %v1047, %v1045
      %v1049 = vrsqrt.pop %v956
      %v1050 = vmul.f32 %v1049, %v956
      %v1051 = vmul.f32 %v1050, %v1049
      %v1052 = vmul.f32 0.5, %v1051
      %v1053 = vsub.f32 1.5, %v1052
      %v1054 = vmul.f32 %v1049, %v1053
      %v1055 = vmul.f32 %v956, %v1054
      %vm1056 = vcmp.eq.f32.partialorder %v956, inf
      %v1057 = vsel %vm1056, %v956, %v1055
      %vm1058 = vcmp.eq.f32.partialorder %v956, 0.0
      %v1059 = vand.u32 %v956, 2147483648
      %v1060 = vsel %vm1058, %v1059, %v1057
      %v1061 = vrsqrt.pop %v957
      %v1062 = vmul.f32 %v1061, %v957
      %v1063 = vmul.f32 %v1062, %v1061
      %v1064 = vmul.f32 0.5, %v1063
      %v1065 = vsub.f32 1.5, %v1064
      %v1066 = vmul.f32 %v1061, %v1065
      %v1067 = vmul.f32 %v957, %v1066
      %vm1068 = vcmp.eq.f32.partialorder %v957, inf
      %v1069 = vsel %vm1068, %v957, %v1067
      %vm1070 = vcmp.eq.f32.partialorder %v957, 0.0
      %v1071 = vand.u32 %v957, 2147483648
      %v1072 = vsel %vm1070, %v1071, %v1069
      %v1073 = vrsqrt.pop %v958
      %v1074 = vmul.f32 %v1073, %v958
      %v1075 = vmul.f32 %v1074, %v1073
      %v1076 = vmul.f32 0.5, %v1075
      %v1077 = vsub.f32 1.5, %v1076
      %v1078 = vmul.f32 %v1073, %v1077
      %v1079 = vmul.f32 %v958, %v1078
      %vm1080 = vcmp.eq.f32.partialorder %v958, inf
      %v1081 = vsel %vm1080, %v958, %v1079
      %vm1082 = vcmp.eq.f32.partialorder %v958, 0.0
      %v1083 = vand.u32 %v958, 2147483648
      %v1084 = vsel %vm1082, %v1083, %v1081
      %v1085 = vrsqrt.pop %v959
      %v1086 = vmul.f32 %v1085, %v959
      %v1087 = vmul.f32 %v1086, %v1085
      %v1088 = vmul.f32 0.5, %v1087
      %v1089 = vsub.f32 1.5, %v1088
      %v1090 = vmul.f32 %v1085, %v1089
      %v1091 = vmul.f32 %v959, %v1090
      %vm1092 = vcmp.eq.f32.partialorder %v959, inf
      %v1093 = vsel %vm1092, %v959, %v1091
      %vm1094 = vcmp.eq.f32.partialorder %v959, 0.0
      %v1095 = vand.u32 %v959, 2147483648
      %v1096 = vsel %vm1094, %v1095, %v1093
      %v1097 = vrsqrt.pop %v960
      %v1098 = vmul.f32 %v1097, %v960
      %v1099 = vmul.f32 %v1098, %v1097
      %v1100 = vmul.f32 0.5, %v1099
      %v1101 = vsub.f32 1.5, %v1100
      %v1102 = vmul.f32 %v1097, %v1101
      %v1103 = vmul.f32 %v960, %v1102
      %vm1104 = vcmp.eq.f32.partialorder %v960, inf
      %v1105 = vsel %vm1104, %v960, %v1103
      %vm1106 = vcmp.eq.f32.partialorder %v960, 0.0
      %v1107 = vand.u32 %v960, 2147483648
      %v1108 = vsel %vm1106, %v1107, %v1105
      %v1109 = vrsqrt.pop %v961
      %v1110 = vmul.f32 %v1109, %v961
      %v1111 = vmul.f32 %v1110, %v1109
      %v1112 = vmul.f32 0.5, %v1111
      %v1113 = vsub.f32 1.5, %v1112
      %v1114 = vmul.f32 %v1109, %v1113
      %v1115 = vmul.f32 %v961, %v1114
      %vm1116 = vcmp.eq.f32.partialorder %v961, inf
      %v1117 = vsel %vm1116, %v961, %v1115
      %vm1118 = vcmp.eq.f32.partialorder %v961, 0.0
      %v1119 = vand.u32 %v961, 2147483648
      %v1120 = vsel %vm1118, %v1119, %v1117
      %v1121 = vrsqrt.pop %v962
      %v1122 = vmul.f32 %v1121, %v962
      %v1123 = vmul.f32 %v1122, %v1121
      %v1124 = vmul.f32 0.5, %v1123
      %v1125 = vsub.f32 1.5, %v1124
      %v1126 = vmul.f32 %v1121, %v1125
      %v1127 = vmul.f32 %v962, %v1126
      %vm1128 = vcmp.eq.f32.partialorder %v962, inf
      %v1129 = vsel %vm1128, %v962, %v1127
      %vm1130 = vcmp.eq.f32.partialorder %v962, 0.0
      %v1131 = vand.u32 %v962, 2147483648
      %v1132 = vsel %vm1130, %v1131, %v1129
      %v1133 = vrsqrt.pop %v963
      %v1134 = vmul.f32 %v1133, %v963
      %v1135 = vmul.f32 %v1134, %v1133
      %v1136 = vmul.f32 0.5, %v1135
      %v1137 = vsub.f32 1.5, %v1136
      %v1138 = vmul.f32 %v1133, %v1137
      %v1139 = vmul.f32 %v963, %v1138
      %vm1140 = vcmp.eq.f32.partialorder %v963, inf
      %v1141 = vsel %vm1140, %v963, %v1139
      %vm1142 = vcmp.eq.f32.partialorder %v963, 0.0
      %v1143 = vand.u32 %v963, 2147483648
      %v1144 = vsel %vm1142, %v1143, %v1141
      %v1145 = vrsqrt.pop %v964
      %v1146 = vmul.f32 %v1145, %v964
      %v1147 = vmul.f32 %v1146, %v1145
      %v1148 = vmul.f32 0.5, %v1147
      %v1149 = vsub.f32 1.5, %v1148
      %v1150 = vmul.f32 %v1145, %v1149
      %v1151 = vmul.f32 %v964, %v1150
      %vm1152 = vcmp.eq.f32.partialorder %v964, inf
      %v1153 = vsel %vm1152, %v964, %v1151
      %vm1154 = vcmp.eq.f32.partialorder %v964, 0.0
      %v1155 = vand.u32 %v964, 2147483648
      %v1156 = vsel %vm1154, %v1155, %v1153
      %v1157 = vrsqrt.pop %v901
      %v1158 = vmul.f32 %v1157, %v901
      %v1159 = vmul.f32 %v1158, %v1157
      %v1160 = vmul.f32 0.5, %v1159
      %v1161 = vsub.f32 1.5, %v1160
      %v1162 = vmul.f32 %v1157, %v1161
      %vm1163 = vweird.f32 %v901
      %vm1164 = vweird.f32 %v1157
      %vm1165 = vmor %vm1163, %vm1164
      %v1166 = vsel %vm1165, %v1157, %v1162
      %v1167 = vrsqrt.pop %v902
      %v1168 = vmul.f32 %v1167, %v902
      %v1169 = vmul.f32 %v1168, %v1167
      %v1170 = vmul.f32 0.5, %v1169
      %v1171 = vsub.f32 1.5, %v1170
      %v1172 = vmul.f32 %v1167, %v1171
      %vm1173 = vweird.f32 %v902
      %vm1174 = vweird.f32 %v1167
      %vm1175 = vmor %vm1173, %vm1174
      %v1176 = vsel %vm1175, %v1167, %v1172
      %v1177 = vrsqrt.pop %v903
      %v1178 = vmul.f32 %v1177, %v903
      %v1179 = vmul.f32 %v1178, %v1177
      %v1180 = vmul.f32 0.5, %v1179
      %v1181 = vsub.f32 1.5, %v1180
      %v1182 = vmul.f32 %v1177, %v1181
      %vm1183 = vweird.f32 %v903
      %vm1184 = vweird.f32 %v1177
      %vm1185 = vmor %vm1183, %vm1184
      %v1186 = vsel %vm1185, %v1177, %v1182
      %v1187 = vrsqrt.pop %v904
      %v1188 = vmul.f32 %v1187, %v904
      %v1189 = vmul.f32 %v1188, %v1187
      %v1190 = vmul.f32 0.5, %v1189
      %v1191 = vsub.f32 1.5, %v1190
      %v1192 = vmul.f32 %v1187, %v1191
      %vm1193 = vweird.f32 %v904
      %vm1194 = vweird.f32 %v1187
      %vm1195 = vmor %vm1193, %vm1194
      %v1196 = vsel %vm1195, %v1187, %v1192
      %v1197 = vrsqrt.pop %v905
      %v1198 = vmul.f32 %v1197, %v905
      %v1199 = vmul.f32 %v1198, %v1197
      %v1200 = vmul.f32 0.5, %v1199
      %v1201 = vsub.f32 1.5, %v1200
      %v1202 = vmul.f32 %v1197, %v1201
      %vm1203 = vweird.f32 %v905
      %vm1204 = vweird.f32 %v1197
      %vm1205 = vmor %vm1203, %vm1204
      %v1206 = vsel %vm1205, %v1197, %v1202
      %v1207 = vrsqrt.pop %v906
      %v1208 = vmul.f32 %v1207, %v906
      %v1209 = vmul.f32 %v1208, %v1207
      %v1210 = vmul.f32 0.5, %v1209
      %v1211 = vsub.f32 1.5, %v1210
      %v1212 = vmul.f32 %v1207, %v1211
      %vm1213 = vweird.f32 %v906
      %vm1214 = vweird.f32 %v1207
      %vm1215 = vmor %vm1213, %vm1214
      %v1216 = vsel %vm1215, %v1207, %v1212
      %v1217 = vrsqrt.pop %v907
      %v1218 = vmul.f32 %v1217, %v907
      %v1219 = vmul.f32 %v1218, %v1217
      %v1220 = vmul.f32 0.5, %v1219
      %v1221 = vsub.f32 1.5, %v1220
      %v1222 = vmul.f32 %v1217, %v1221
      %vm1223 = vweird.f32 %v907
      %vm1224 = vweird.f32 %v1217
      %vm1225 = vmor %vm1223, %vm1224
      %v1226 = vsel %vm1225, %v1217, %v1222
      %v1227 = vrsqrt.pop %v908
      %v1228 = vmul.f32 %v1227, %v908
      %v1229 = vmul.f32 %v1228, %v1227
      %v1230 = vmul.f32 0.5, %v1229
      %v1231 = vsub.f32 1.5, %v1230
      %v1232 = vmul.f32 %v1227, %v1231
      %vm1233 = vweird.f32 %v908
      %vm1234 = vweird.f32 %v1227
      %vm1235 = vmor %vm1233, %vm1234
      %v1236 = vsel %vm1235, %v1227, %v1232
      %v1237 = vrsqrt.pop %v909
      %v1238 = vmul.f32 %v1237, %v909
      %v1239 = vmul.f32 %v1238, %v1237
      %v1240 = vmul.f32 0.5, %v1239
      %v1241 = vsub.f32 1.5, %v1240
      %v1242 = vmul.f32 %v1237, %v1241
      %vm1243 = vweird.f32 %v909
      %vm1244 = vweird.f32 %v1237
      %vm1245 = vmor %vm1243, %vm1244
      %v1246 = vsel %vm1245, %v1237, %v1242
      %v1247 = vrsqrt.pop %v910
      %v1248 = vmul.f32 %v1247, %v910
      %v1249 = vmul.f32 %v1248, %v1247
      %v1250 = vmul.f32 0.5, %v1249
      %v1251 = vsub.f32 1.5, %v1250
      %v1252 = vmul.f32 %v1247, %v1251
      %vm1253 = vweird.f32 %v910
      %vm1254 = vweird.f32 %v1247
      %vm1255 = vmor %vm1253, %vm1254
      %v1256 = vsel %vm1255, %v1247, %v1252
      %v1257 = vrsqrt.pop %v911
      %v1258 = vmul.f32 %v1257, %v911
      %v1259 = vmul.f32 %v1258, %v1257
      %v1260 = vmul.f32 0.5, %v1259
      %v1261 = vsub.f32 1.5, %v1260
      %v1262 = vmul.f32 %v1257, %v1261
      %vm1263 = vweird.f32 %v911
      %vm1264 = vweird.f32 %v1257
      %vm1265 = vmor %vm1263, %vm1264
      %v1266 = vsel %vm1265, %v1257, %v1262
      %v1267 = vrsqrt.pop %v912
      %v1268 = vmul.f32 %v1267, %v912
      %v1269 = vmul.f32 %v1268, %v1267
      %v1270 = vmul.f32 0.5, %v1269
      %v1271 = vsub.f32 1.5, %v1270
      %v1272 = vmul.f32 %v1267, %v1271
      %vm1273 = vweird.f32 %v912
      %vm1274 = vweird.f32 %v1267
      %vm1275 = vmor %vm1273, %vm1274
      %v1276 = vsel %vm1275, %v1267, %v1272
      %v1277 = vrsqrt.pop %v913
      %v1278 = vmul.f32 %v1277, %v913
      %v1279 = vmul.f32 %v1278, %v1277
      %v1280 = vmul.f32 0.5, %v1279
      %v1281 = vsub.f32 1.5, %v1280
      %v1282 = vmul.f32 %v1277, %v1281
      %vm1283 = vweird.f32 %v913
      %vm1284 = vweird.f32 %v1277
      %vm1285 = vmor %vm1283, %vm1284
      %v1286 = vsel %vm1285, %v1277, %v1282
      %v1287 = vrsqrt.pop %v914
      %v1288 = vmul.f32 %v1287, %v914
      %v1289 = vmul.f32 %v1288, %v1287
      %v1290 = vmul.f32 0.5, %v1289
      %v1291 = vsub.f32 1.5, %v1290
      %v1292 = vmul.f32 %v1287, %v1291
      %vm1293 = vweird.f32 %v914
      %vm1294 = vweird.f32 %v1287
      %vm1295 = vmor %vm1293, %vm1294
      %v1296 = vsel %vm1295, %v1287, %v1292
      %v1297 = vrsqrt.pop %v915
      %v1298 = vmul.f32 %v1297, %v915
      %v1299 = vmul.f32 %v1298, %v1297
      %v1300 = vmul.f32 0.5, %v1299
      %v1301 = vsub.f32 1.5, %v1300
      %v1302 = vmul.f32 %v1297, %v1301
      %vm1303 = vweird.f32 %v915
      %vm1304 = vweird.f32 %v1297
      %vm1305 = vmor %vm1303, %vm1304
      %v1306 = vsel %vm1305, %v1297, %v1302
      %v1307 = vrsqrt.pop %v916
      %v1308 = vmul.f32 %v1307, %v916
      %v1309 = vmul.f32 %v1308, %v1307
      %v1310 = vmul.f32 0.5, %v1309
      %v1311 = vsub.f32 1.5, %v1310
      %v1312 = vmul.f32 %v1307, %v1311
      %vm1313 = vweird.f32 %v916
      %vm1314 = vweird.f32 %v1307
      %vm1315 = vmor %vm1313, %vm1314
      %v1316 = vsel %vm1315, %v1307, %v1312
      %v1317 = vmul.f32 %v976, %v1166
      %v1318 = vmul.f32 %v988, %v1176
      %v1319 = vmul.f32 %v1000, %v1186
      %v1320 = vmul.f32 %v1012, %v1196
      %v1321 = vmul.f32 %v1024, %v1206
      %v1322 = vmul.f32 %v1036, %v1216
      %v1323 = vmul.f32 %v1048, %v1226
      %v1324 = vmul.f32 %v1060, %v1236
      %v1325 = vmul.f32 %v1072, %v1246
      %v1326 = vmul.f32 %v1084, %v1256
      %v1327 = vmul.f32 %v1096, %v1266
      %v1328 = vmul.f32 %v1108, %v1276
      %v1329 = vmul.f32 %v1120, %v1286
      %v1330 = vmul.f32 %v1132, %v1296
      %v1331 = vmul.f32 %v1144, %v1306
      %v1332 = vmul.f32 %v1156, %v1316
      %1334 = vset.pattern.permute.xlu0 0
      %1335 = vperm.xlu0 %1334, %v1317
      %v1336 = vpop.permute.xlu0 %1335
      %1339 = vset.pattern.permute.xlu0 0
      %1340 = vperm.xlu0 %1339, %v1318
      %v1341 = vpop.permute.xlu0 %1340
      %1344 = vset.pattern.permute.xlu0 0
      %1345 = vperm.xlu0 %1344, %v1319
      %v1346 = vpop.permute.xlu0 %1345
      %1349 = vset.pattern.permute.xlu0 0
      %1350 = vperm.xlu0 %1349, %v1320
      %v1351 = vpop.permute.xlu0 %1350
      %1354 = vset.pattern.permute.xlu0 0
      %1355 = vperm.xlu0 %1354, %v1321
      %v1356 = vpop.permute.xlu0 %1355
      %1359 = vset.pattern.permute.xlu0 0
      %1360 = vperm.xlu0 %1359, %v1322
      %v1361 = vpop.permute.xlu0 %1360
      %1364 = vset.pattern.permute.xlu0 0
      %1365 = vperm.xlu0 %1364, %v1323
      %v1366 = vpop.permute.xlu0 %1365
      %1369 = vset.pattern.permute.xlu0 0
      %1370 = vperm.xlu0 %1369, %v1324
      %v1371 = vpop.permute.xlu0 %1370
      %1374 = vset.pattern.permute.xlu0 0
      %1375 = vperm.xlu0 %1374, %v1325
      %v1376 = vpop.permute.xlu0 %1375
      %1379 = vset.pattern.permute.xlu0 0
      %1380 = vperm.xlu0 %1379, %v1326
      %v1381 = vpop.permute.xlu0 %1380
      %1384 = vset.pattern.permute.xlu0 0
      %1385 = vperm.xlu0 %1384, %v1327
      %v1386 = vpop.permute.xlu0 %1385
      %1389 = vset.pattern.permute.xlu0 0
      %1390 = vperm.xlu0 %1389, %v1328
      %v1391 = vpop.permute.xlu0 %1390
      %1394 = vset.pattern.permute.xlu0 0
      %1395 = vperm.xlu0 %1394, %v1329
      %v1396 = vpop.permute.xlu0 %1395
      %1399 = vset.pattern.permute.xlu0 0
      %1400 = vperm.xlu0 %1399, %v1330
      %v1401 = vpop.permute.xlu0 %1400
      %1404 = vset.pattern.permute.xlu0 0
      %1405 = vperm.xlu0 %1404, %v1331
      %v1406 = vpop.permute.xlu0 %1405
      %1409 = vset.pattern.permute.xlu0 0
      %1410 = vperm.xlu0 %1409, %v1332
      %v1411 = vpop.permute.xlu0 %1410
      %v1413 = vmul.f32 %v363, %v1336
      %v1414 = vmul.f32 %v366, %v1341
      %v1415 = vmul.f32 %v369, %v1346
      %v1416 = vmul.f32 %v372, %v1351
      %v1417 = vmul.f32 %v375, %v1356
      %v1418 = vmul.f32 %v378, %v1361
      %v1419 = vmul.f32 %v381, %v1366
      %v1420 = vmul.f32 %v384, %v1371
      %v1421 = vmul.f32 %v387, %v1376
      %v1422 = vmul.f32 %v390, %v1381
      %v1423 = vmul.f32 %v393, %v1386
      %v1424 = vmul.f32 %v396, %v1391
      %v1425 = vmul.f32 %v399, %v1396
      %v1426 = vmul.f32 %v402, %v1401
      %v1427 = vmul.f32 %v405, %v1406
      %v1428 = vmul.f32 %v408, %v1411
      %1430 = vset.pattern.permute.xlu0 0
      %1431 = vperm.xlu0 %1430, %v803
      %v1432 = vpop.permute.xlu0 %1431
      %1435 = vset.pattern.permute.xlu0 0
      %1436 = vperm.xlu0 %1435, %v804
      %v1437 = vpop.permute.xlu0 %1436
      %1440 = vset.pattern.permute.xlu0 0
      %1441 = vperm.xlu0 %1440, %v805
      %v1442 = vpop.permute.xlu0 %1441
      %1445 = vset.pattern.permute.xlu0 0
      %1446 = vperm.xlu0 %1445, %v806
      %v1447 = vpop.permute.xlu0 %1446
      %1450 = vset.pattern.permute.xlu0 0
      %1451 = vperm.xlu0 %1450, %v807
      %v1452 = vpop.permute.xlu0 %1451
      %1455 = vset.pattern.permute.xlu0 0
      %1456 = vperm.xlu0 %1455, %v808
      %v1457 = vpop.permute.xlu0 %1456
      %1460 = vset.pattern.permute.xlu0 0
      %1461 = vperm.xlu0 %1460, %v809
      %v1462 = vpop.permute.xlu0 %1461
      %1465 = vset.pattern.permute.xlu0 0
      %1466 = vperm.xlu0 %1465, %v810
      %v1467 = vpop.permute.xlu0 %1466
      %1470 = vset.pattern.permute.xlu0 0
      %1471 = vperm.xlu0 %1470, %v811
      %v1472 = vpop.permute.xlu0 %1471
      %1475 = vset.pattern.permute.xlu0 0
      %1476 = vperm.xlu0 %1475, %v812
      %v1477 = vpop.permute.xlu0 %1476
      %1480 = vset.pattern.permute.xlu0 0
      %1481 = vperm.xlu0 %1480, %v813
      %v1482 = vpop.permute.xlu0 %1481
      %1485 = vset.pattern.permute.xlu0 0
      %1486 = vperm.xlu0 %1485, %v814
      %v1487 = vpop.permute.xlu0 %1486
      %1490 = vset.pattern.permute.xlu0 0
      %1491 = vperm.xlu0 %1490, %v815
      %v1492 = vpop.permute.xlu0 %1491
      %1495 = vset.pattern.permute.xlu0 0
      %1496 = vperm.xlu0 %1495, %v816
      %v1497 = vpop.permute.xlu0 %1496
      %1500 = vset.pattern.permute.xlu0 0
      %1501 = vperm.xlu0 %1500, %v817
      %v1502 = vpop.permute.xlu0 %1501
      %1505 = vset.pattern.permute.xlu0 0
      %1506 = vperm.xlu0 %1505, %v818
      %v1507 = vpop.permute.xlu0 %1506
      %v1509 = vsel %vm820, %v1432, %v1413
      %v1510 = vsel %vm820, %v1437, %v1414
      %v1511 = vsel %vm820, %v1442, %v1415
      %v1512 = vsel %vm820, %v1447, %v1416
      %v1513 = vsel %vm820, %v1452, %v1417
      %v1514 = vsel %vm820, %v1457, %v1418
      %v1515 = vsel %vm820, %v1462, %v1419
      %v1516 = vsel %vm820, %v1467, %v1420
      %v1517 = vsel %vm820, %v1472, %v1421
      %v1518 = vsel %vm820, %v1477, %v1422
      %v1519 = vsel %vm820, %v1482, %v1423
      %v1520 = vsel %vm820, %v1487, %v1424
      %v1521 = vsel %vm820, %v1492, %v1425
      %v1522 = vsel %vm820, %v1497, %v1426
      %v1523 = vsel %vm820, %v1502, %v1427
      %v1524 = vsel %vm820, %v1507, %v1428
      %v1525 = vxor.u32 %v436, 2147483648
      %v1526 = vxor.u32 %v439, 2147483648
      %v1527 = vxor.u32 %v442, 2147483648
      %v1528 = vxor.u32 %v445, 2147483648
      %v1529 = vxor.u32 %v448, 2147483648
      %v1530 = vxor.u32 %v451, 2147483648
      %v1531 = vxor.u32 %v454, 2147483648
      %v1532 = vxor.u32 %v457, 2147483648
      %v1533 = vxor.u32 %v460, 2147483648
      %v1534 = vxor.u32 %v463, 2147483648
      %v1535 = vxor.u32 %v466, 2147483648
      %v1536 = vxor.u32 %v469, 2147483648
      %v1537 = vxor.u32 %v472, 2147483648
      %v1538 = vxor.u32 %v475, 2147483648
      %v1539 = vxor.u32 %v478, 2147483648
      %v1540 = vxor.u32 %v481, 2147483648
      %v1541 = vmul.f32 %v1525, 1.442695
      %v1542 = vpow.pop %v1541
      %v1543 = vmul.f32 %v1526, 1.442695
      %v1544 = vpow.pop %v1543
      %v1545 = vmul.f32 %v1527, 1.442695
      %v1546 = vpow.pop %v1545
      %v1547 = vmul.f32 %v1528, 1.442695
      %v1548 = vpow.pop %v1547
      %v1549 = vmul.f32 %v1529, 1.442695
      %v1550 = vpow.pop %v1549
      %v1551 = vmul.f32 %v1530, 1.442695
      %v1552 = vpow.pop %v1551
      %v1553 = vmul.f32 %v1531, 1.442695
      %v1554 = vpow.pop %v1553
      %v1555 = vmul.f32 %v1532, 1.442695
      %v1556 = vpow.pop %v1555
      %v1557 = vmul.f32 %v1533, 1.442695
      %v1558 = vpow.pop %v1557
      %v1559 = vmul.f32 %v1534, 1.442695
      %v1560 = vpow.pop %v1559
      %v1561 = vmul.f32 %v1535, 1.442695
      %v1562 = vpow.pop %v1561
      %v1563 = vmul.f32 %v1536, 1.442695
      %v1564 = vpow.pop %v1563
      %v1565 = vmul.f32 %v1537, 1.442695
      %v1566 = vpow.pop %v1565
      %v1567 = vmul.f32 %v1538, 1.442695
      %v1568 = vpow.pop %v1567
      %v1569 = vmul.f32 %v1539, 1.442695
      %v1570 = vpow.pop %v1569
      %v1571 = vmul.f32 %v1540, 1.442695
      %v1572 = vpow.pop %v1571
      %v1573 = vadd.f32 %v1542, 1.0
      %v1574 = vadd.f32 %v1544, 1.0
      %v1575 = vadd.f32 %v1546, 1.0
      %v1576 = vadd.f32 %v1548, 1.0
      %v1577 = vadd.f32 %v1550, 1.0
      %v1578 = vadd.f32 %v1552, 1.0
      %v1579 = vadd.f32 %v1554, 1.0
      %v1580 = vadd.f32 %v1556, 1.0
      %v1581 = vadd.f32 %v1558, 1.0
      %v1582 = vadd.f32 %v1560, 1.0
      %v1583 = vadd.f32 %v1562, 1.0
      %v1584 = vadd.f32 %v1564, 1.0
      %v1585 = vadd.f32 %v1566, 1.0
      %v1586 = vadd.f32 %v1568, 1.0
      %v1587 = vadd.f32 %v1570, 1.0
      %v1588 = vadd.f32 %v1572, 1.0
      %v1589 = vrcp.pop %v1573
      %v1590 = vmul.f32 %v1573, %v1589
      %v1591 = vsub.f32 1.0, %v1590
      %v1592 = vmul.f32 %v1589, %v1591
      %v1593 = vadd.f32 %v1589, %v1592
      %vm1594 = vweird.f32 %v1573
      %vm1595 = vweird.f32 %v1589
      %vm1596 = vmor %vm1594, %vm1595
      %v1597 = vsel %vm1596, %v1589, %v1593
      %v1598 = vand.u32 2147483647, %v1573
      %vm1599 = vcmp.eq.f32.partialorder %v1598, 8.507059e+37
      %v1600 = vand.u32 %v1573, 2147483648
      %v1601 = vor.u32 1.1754944e-38, %v1600
      %v1602 = vsel %vm1599, %v1601, %v1597
      %v1603 = vmul.f32 1.0, %v1602
      %v1604 = vrcp.pop %v1574
      %v1605 = vmul.f32 %v1574, %v1604
      %v1606 = vsub.f32 1.0, %v1605
      %v1607 = vmul.f32 %v1604, %v1606
      %v1608 = vadd.f32 %v1604, %v1607
      %vm1609 = vweird.f32 %v1574
      %vm1610 = vweird.f32 %v1604
      %vm1611 = vmor %vm1609, %vm1610
      %v1612 = vsel %vm1611, %v1604, %v1608
      %v1613 = vand.u32 2147483647, %v1574
      %vm1614 = vcmp.eq.f32.partialorder %v1613, 8.507059e+37
      %v1615 = vand.u32 %v1574, 2147483648
      %v1616 = vor.u32 1.1754944e-38, %v1615
      %v1617 = vsel %vm1614, %v1616, %v1612
      %v1618 = vmul.f32 1.0, %v1617
      %v1619 = vrcp.pop %v1575
      %v1620 = vmul.f32 %v1575, %v1619
      %v1621 = vsub.f32 1.0, %v1620
      %v1622 = vmul.f32 %v1619, %v1621
      %v1623 = vadd.f32 %v1619, %v1622
      %vm1624 = vweird.f32 %v1575
      %vm1625 = vweird.f32 %v1619
      %vm1626 = vmor %vm1624, %vm1625
      %v1627 = vsel %vm1626, %v1619, %v1623
      %v1628 = vand.u32 2147483647, %v1575
      %vm1629 = vcmp.eq.f32.partialorder %v1628, 8.507059e+37
      %v1630 = vand.u32 %v1575, 2147483648
      %v1631 = vor.u32 1.1754944e-38, %v1630
      %v1632 = vsel %vm1629, %v1631, %v1627
      %v1633 = vmul.f32 1.0, %v1632
      %v1634 = vrcp.pop %v1576
      %v1635 = vmul.f32 %v1576, %v1634
      %v1636 = vsub.f32 1.0, %v1635
      %v1637 = vmul.f32 %v1634, %v1636
      %v1638 = vadd.f32 %v1634, %v1637
      %vm1639 = vweird.f32 %v1576
      %vm1640 = vweird.f32 %v1634
      %vm1641 = vmor %vm1639, %vm1640
      %v1642 = vsel %vm1641, %v1634, %v1638
      %v1643 = vand.u32 2147483647, %v1576
      %vm1644 = vcmp.eq.f32.partialorder %v1643, 8.507059e+37
      %v1645 = vand.u32 %v1576, 2147483648
      %v1646 = vor.u32 1.1754944e-38, %v1645
      %v1647 = vsel %vm1644, %v1646, %v1642
      %v1648 = vmul.f32 1.0, %v1647
      %v1649 = vrcp.pop %v1577
      %v1650 = vmul.f32 %v1577, %v1649
      %v1651 = vsub.f32 1.0, %v1650
      %v1652 = vmul.f32 %v1649, %v1651
      %v1653 = vadd.f32 %v1649, %v1652
      %vm1654 = vweird.f32 %v1577
      %vm1655 = vweird.f32 %v1649
      %vm1656 = vmor %vm1654, %vm1655
      %v1657 = vsel %vm1656, %v1649, %v1653
      %v1658 = vand.u32 2147483647, %v1577
      %vm1659 = vcmp.eq.f32.partialorder %v1658, 8.507059e+37
      %v1660 = vand.u32 %v1577, 2147483648
      %v1661 = vor.u32 1.1754944e-38, %v1660
      %v1662 = vsel %vm1659, %v1661, %v1657
      %v1663 = vmul.f32 1.0, %v1662
      %v1664 = vrcp.pop %v1578
      %v1665 = vmul.f32 %v1578, %v1664
      %v1666 = vsub.f32 1.0, %v1665
      %v1667 = vmul.f32 %v1664, %v1666
      %v1668 = vadd.f32 %v1664, %v1667
      %vm1669 = vweird.f32 %v1578
      %vm1670 = vweird.f32 %v1664
      %vm1671 = vmor %vm1669, %vm1670
      %v1672 = vsel %vm1671, %v1664, %v1668
      %v1673 = vand.u32 2147483647, %v1578
      %vm1674 = vcmp.eq.f32.partialorder %v1673, 8.507059e+37
      %v1675 = vand.u32 %v1578, 2147483648
      %v1676 = vor.u32 1.1754944e-38, %v1675
      %v1677 = vsel %vm1674, %v1676, %v1672
      %v1678 = vmul.f32 1.0, %v1677
      %v1679 = vrcp.pop %v1579
      %v1680 = vmul.f32 %v1579, %v1679
      %v1681 = vsub.f32 1.0, %v1680
      %v1682 = vmul.f32 %v1679, %v1681
      %v1683 = vadd.f32 %v1679, %v1682
      %vm1684 = vweird.f32 %v1579
      %vm1685 = vweird.f32 %v1679
      %vm1686 = vmor %vm1684, %vm1685
      %v1687 = vsel %vm1686, %v1679, %v1683
      %v1688 = vand.u32 2147483647, %v1579
      %vm1689 = vcmp.eq.f32.partialorder %v1688, 8.507059e+37
      %v1690 = vand.u32 %v1579, 2147483648
      %v1691 = vor.u32 1.1754944e-38, %v1690
      %v1692 = vsel %vm1689, %v1691, %v1687
      %v1693 = vmul.f32 1.0, %v1692
      %v1694 = vrcp.pop %v1580
      %v1695 = vmul.f32 %v1580, %v1694
      %v1696 = vsub.f32 1.0, %v1695
      %v1697 = vmul.f32 %v1694, %v1696
      %v1698 = vadd.f32 %v1694, %v1697
      %vm1699 = vweird.f32 %v1580
      %vm1700 = vweird.f32 %v1694
      %vm1701 = vmor %vm1699, %vm1700
      %v1702 = vsel %vm1701, %v1694, %v1698
      %v1703 = vand.u32 2147483647, %v1580
      %vm1704 = vcmp.eq.f32.partialorder %v1703, 8.507059e+37
      %v1705 = vand.u32 %v1580, 2147483648
      %v1706 = vor.u32 1.1754944e-38, %v1705
      %v1707 = vsel %vm1704, %v1706, %v1702
      %v1708 = vmul.f32 1.0, %v1707
      %v1709 = vrcp.pop %v1581
      %v1710 = vmul.f32 %v1581, %v1709
      %v1711 = vsub.f32 1.0, %v1710
      %v1712 = vmul.f32 %v1709, %v1711
      %v1713 = vadd.f32 %v1709, %v1712
      %vm1714 = vweird.f32 %v1581
      %vm1715 = vweird.f32 %v1709
      %vm1716 = vmor %vm1714, %vm1715
      %v1717 = vsel %vm1716, %v1709, %v1713
      %v1718 = vand.u32 2147483647, %v1581
      %vm1719 = vcmp.eq.f32.partialorder %v1718, 8.507059e+37
      %v1720 = vand.u32 %v1581, 2147483648
      %v1721 = vor.u32 1.1754944e-38, %v1720
      %v1722 = vsel %vm1719, %v1721, %v1717
      %v1723 = vmul.f32 1.0, %v1722
      %v1724 = vrcp.pop %v1582
      %v1725 = vmul.f32 %v1582, %v1724
      %v1726 = vsub.f32 1.0, %v1725
      %v1727 = vmul.f32 %v1724, %v1726
      %v1728 = vadd.f32 %v1724, %v1727
      %vm1729 = vweird.f32 %v1582
      %vm1730 = vweird.f32 %v1724
      %vm1731 = vmor %vm1729, %vm1730
      %v1732 = vsel %vm1731, %v1724, %v1728
      %v1733 = vand.u32 2147483647, %v1582
      %vm1734 = vcmp.eq.f32.partialorder %v1733, 8.507059e+37
      %v1735 = vand.u32 %v1582, 2147483648
      %v1736 = vor.u32 1.1754944e-38, %v1735
      %v1737 = vsel %vm1734, %v1736, %v1732
      %v1738 = vmul.f32 1.0, %v1737
      %v1739 = vrcp.pop %v1583
      %v1740 = vmul.f32 %v1583, %v1739
      %v1741 = vsub.f32 1.0, %v1740
      %v1742 = vmul.f32 %v1739, %v1741
      %v1743 = vadd.f32 %v1739, %v1742
      %vm1744 = vweird.f32 %v1583
      %vm1745 = vweird.f32 %v1739
      %vm1746 = vmor %vm1744, %vm1745
      %v1747 = vsel %vm1746, %v1739, %v1743
      %v1748 = vand.u32 2147483647, %v1583
      %vm1749 = vcmp.eq.f32.partialorder %v1748, 8.507059e+37
      %v1750 = vand.u32 %v1583, 2147483648
      %v1751 = vor.u32 1.1754944e-38, %v1750
      %v1752 = vsel %vm1749, %v1751, %v1747
      %v1753 = vmul.f32 1.0, %v1752
      %v1754 = vrcp.pop %v1584
      %v1755 = vmul.f32 %v1584, %v1754
      %v1756 = vsub.f32 1.0, %v1755
      %v1757 = vmul.f32 %v1754, %v1756
      %v1758 = vadd.f32 %v1754, %v1757
      %vm1759 = vweird.f32 %v1584
      %vm1760 = vweird.f32 %v1754
      %vm1761 = vmor %vm1759, %vm1760
      %v1762 = vsel %vm1761, %v1754, %v1758
      %v1763 = vand.u32 2147483647, %v1584
      %vm1764 = vcmp.eq.f32.partialorder %v1763, 8.507059e+37
      %v1765 = vand.u32 %v1584, 2147483648
      %v1766 = vor.u32 1.1754944e-38, %v1765
      %v1767 = vsel %vm1764, %v1766, %v1762
      %v1768 = vmul.f32 1.0, %v1767
      %v1769 = vrcp.pop %v1585
      %v1770 = vmul.f32 %v1585, %v1769
      %v1771 = vsub.f32 1.0, %v1770
      %v1772 = vmul.f32 %v1769, %v1771
      %v1773 = vadd.f32 %v1769, %v1772
      %vm1774 = vweird.f32 %v1585
      %vm1775 = vweird.f32 %v1769
      %vm1776 = vmor %vm1774, %vm1775
      %v1777 = vsel %vm1776, %v1769, %v1773
      %v1778 = vand.u32 2147483647, %v1585
      %vm1779 = vcmp.eq.f32.partialorder %v1778, 8.507059e+37
      %v1780 = vand.u32 %v1585, 2147483648
      %v1781 = vor.u32 1.1754944e-38, %v1780
      %v1782 = vsel %vm1779, %v1781, %v1777
      %v1783 = vmul.f32 1.0, %v1782
      %v1784 = vrcp.pop %v1586
      %v1785 = vmul.f32 %v1586, %v1784
      %v1786 = vsub.f32 1.0, %v1785
      %v1787 = vmul.f32 %v1784, %v1786
      %v1788 = vadd.f32 %v1784, %v1787
      %vm1789 = vweird.f32 %v1586
      %vm1790 = vweird.f32 %v1784
      %vm1791 = vmor %vm1789, %vm1790
      %v1792 = vsel %vm1791, %v1784, %v1788
      %v1793 = vand.u32 2147483647, %v1586
      %vm1794 = vcmp.eq.f32.partialorder %v1793, 8.507059e+37
      %v1795 = vand.u32 %v1586, 2147483648
      %v1796 = vor.u32 1.1754944e-38, %v1795
      %v1797 = vsel %vm1794, %v1796, %v1792
      %v1798 = vmul.f32 1.0, %v1797
      %v1799 = vrcp.pop %v1587
      %v1800 = vmul.f32 %v1587, %v1799
      %v1801 = vsub.f32 1.0, %v1800
      %v1802 = vmul.f32 %v1799, %v1801
      %v1803 = vadd.f32 %v1799, %v1802
      %vm1804 = vweird.f32 %v1587
      %vm1805 = vweird.f32 %v1799
      %vm1806 = vmor %vm1804, %vm1805
      %v1807 = vsel %vm1806, %v1799, %v1803
      %v1808 = vand.u32 2147483647, %v1587
      %vm1809 = vcmp.eq.f32.partialorder %v1808, 8.507059e+37
      %v1810 = vand.u32 %v1587, 2147483648
      %v1811 = vor.u32 1.1754944e-38, %v1810
      %v1812 = vsel %vm1809, %v1811, %v1807
      %v1813 = vmul.f32 1.0, %v1812
      %v1814 = vrcp.pop %v1588
      %v1815 = vmul.f32 %v1588, %v1814
      %v1816 = vsub.f32 1.0, %v1815
      %v1817 = vmul.f32 %v1814, %v1816
      %v1818 = vadd.f32 %v1814, %v1817
      %vm1819 = vweird.f32 %v1588
      %vm1820 = vweird.f32 %v1814
      %vm1821 = vmor %vm1819, %vm1820
      %v1822 = vsel %vm1821, %v1814, %v1818
      %v1823 = vand.u32 2147483647, %v1588
      %vm1824 = vcmp.eq.f32.partialorder %v1823, 8.507059e+37
      %v1825 = vand.u32 %v1588, 2147483648
      %v1826 = vor.u32 1.1754944e-38, %v1825
      %v1827 = vsel %vm1824, %v1826, %v1822
      %v1828 = vmul.f32 1.0, %v1827
      %v1829 = vmul.f32 %v1603, 10.0
      %v1830 = vmul.f32 %v1618, 10.0
      %v1831 = vmul.f32 %v1633, 10.0
      %v1832 = vmul.f32 %v1648, 10.0
      %v1833 = vmul.f32 %v1663, 10.0
      %v1834 = vmul.f32 %v1678, 10.0
      %v1835 = vmul.f32 %v1693, 10.0
      %v1836 = vmul.f32 %v1708, 10.0
      %v1837 = vmul.f32 %v1723, 10.0
      %v1838 = vmul.f32 %v1738, 10.0
      %v1839 = vmul.f32 %v1753, 10.0
      %v1840 = vmul.f32 %v1768, 10.0
      %v1841 = vmul.f32 %v1783, 10.0
      %v1842 = vmul.f32 %v1798, 10.0
      %v1843 = vmul.f32 %v1813, 10.0
      %v1844 = vmul.f32 %v1828, 10.0
      %v1845 = vadd.f32 %v1829, 1.5
      %v1846 = vadd.f32 %v1830, 1.5
      %v1847 = vadd.f32 %v1831, 1.5
      %v1848 = vadd.f32 %v1832, 1.5
      %v1849 = vadd.f32 %v1833, 1.5
      %v1850 = vadd.f32 %v1834, 1.5
      %v1851 = vadd.f32 %v1835, 1.5
      %v1852 = vadd.f32 %v1836, 1.5
      %v1853 = vadd.f32 %v1837, 1.5
      %v1854 = vadd.f32 %v1838, 1.5
      %v1855 = vadd.f32 %v1839, 1.5
      %v1856 = vadd.f32 %v1840, 1.5
      %v1857 = vadd.f32 %v1841, 1.5
      %v1858 = vadd.f32 %v1842, 1.5
      %v1859 = vadd.f32 %v1843, 1.5
      %v1860 = vadd.f32 %v1844, 1.5
      %v1861 = vsel %vm820, 0.0, %v436
      %v1862 = vsel %vm820, 0.0, %v439
      %v1863 = vsel %vm820, 0.0, %v442
      %v1864 = vsel %vm820, 0.0, %v445
      %v1865 = vsel %vm820, 0.0, %v448
      %v1866 = vsel %vm820, 0.0, %v451
      %v1867 = vsel %vm820, 0.0, %v454
      %v1868 = vsel %vm820, 0.0, %v457
      %v1869 = vsel %vm820, 0.0, %v460
      %v1870 = vsel %vm820, 0.0, %v463
      %v1871 = vsel %vm820, 0.0, %v466
      %v1872 = vsel %vm820, 0.0, %v469
      %v1873 = vsel %vm820, 0.0, %v472
      %v1874 = vsel %vm820, 0.0, %v475
      %v1875 = vsel %vm820, 0.0, %v478
      %v1876 = vsel %vm820, 0.0, %v481
      %v1877 = vmul.f32 %v1861, %v1861
      %v1878 = vmul.f32 %v1862, %v1862
      %v1879 = vmul.f32 %v1863, %v1863
      %v1880 = vmul.f32 %v1864, %v1864
      %v1881 = vmul.f32 %v1865, %v1865
      %v1882 = vmul.f32 %v1866, %v1866
      %v1883 = vmul.f32 %v1867, %v1867
      %v1884 = vmul.f32 %v1868, %v1868
      %v1885 = vmul.f32 %v1869, %v1869
      %v1886 = vmul.f32 %v1870, %v1870
      %v1887 = vmul.f32 %v1871, %v1871
      %v1888 = vmul.f32 %v1872, %v1872
      %v1889 = vmul.f32 %v1873, %v1873
      %v1890 = vmul.f32 %v1874, %v1874
      %v1891 = vmul.f32 %v1875, %v1875
      %v1892 = vmul.f32 %v1876, %v1876
      %v1893 = vsel %vm296, %v1877, 0.0
      %1894 = vadd.xlane.f32.xlu0 %v1893
      %v1895 = vpop.xlane.xlu0 %1894
      %v1896 = vsel %vm296, %v1878, 0.0
      %1897 = vadd.xlane.f32.xlu0 %v1896
      %v1898 = vpop.xlane.xlu0 %1897
      %v1899 = vsel %vm296, %v1879, 0.0
      %1900 = vadd.xlane.f32.xlu0 %v1899
      %v1901 = vpop.xlane.xlu0 %1900
      %v1902 = vsel %vm296, %v1880, 0.0
      %1903 = vadd.xlane.f32.xlu0 %v1902
      %v1904 = vpop.xlane.xlu0 %1903
      %v1905 = vsel %vm296, %v1881, 0.0
      %1906 = vadd.xlane.f32.xlu0 %v1905
      %v1907 = vpop.xlane.xlu0 %1906
      %v1908 = vsel %vm296, %v1882, 0.0
      %1909 = vadd.xlane.f32.xlu0 %v1908
      %v1910 = vpop.xlane.xlu0 %1909
      %v1911 = vsel %vm296, %v1883, 0.0
      %1912 = vadd.xlane.f32.xlu0 %v1911
      %v1913 = vpop.xlane.xlu0 %1912
      %v1914 = vsel %vm296, %v1884, 0.0
      %1915 = vadd.xlane.f32.xlu0 %v1914
      %v1916 = vpop.xlane.xlu0 %1915
      %v1917 = vsel %vm296, %v1885, 0.0
      %1918 = vadd.xlane.f32.xlu0 %v1917
      %v1919 = vpop.xlane.xlu0 %1918
      %v1920 = vsel %vm296, %v1886, 0.0
      %1921 = vadd.xlane.f32.xlu0 %v1920
      %v1922 = vpop.xlane.xlu0 %1921
      %v1923 = vsel %vm296, %v1887, 0.0
      %1924 = vadd.xlane.f32.xlu0 %v1923
      %v1925 = vpop.xlane.xlu0 %1924
      %v1926 = vsel %vm296, %v1888, 0.0
      %1927 = vadd.xlane.f32.xlu0 %v1926
      %v1928 = vpop.xlane.xlu0 %1927
      %v1929 = vsel %vm296, %v1889, 0.0
      %1930 = vadd.xlane.f32.xlu0 %v1929
      %v1931 = vpop.xlane.xlu0 %1930
      %v1932 = vsel %vm296, %v1890, 0.0
      %1933 = vadd.xlane.f32.xlu0 %v1932
      %v1934 = vpop.xlane.xlu0 %1933
      %v1935 = vsel %vm296, %v1891, 0.0
      %1936 = vadd.xlane.f32.xlu0 %v1935
      %v1937 = vpop.xlane.xlu0 %1936
      %v1938 = vsel %vm296, %v1892, 0.0
      %1939 = vadd.xlane.f32.xlu0 %v1938
      %v1940 = vpop.xlane.xlu0 %1939
      %v1941 = vmax.f32 %v1895, 1e-08
      %v1942 = vmax.f32 %v1898, 1e-08
      %v1943 = vmax.f32 %v1901, 1e-08
      %v1944 = vmax.f32 %v1904, 1e-08
      %v1945 = vmax.f32 %v1907, 1e-08
      %v1946 = vmax.f32 %v1910, 1e-08
      %v1947 = vmax.f32 %v1913, 1e-08
      %v1948 = vmax.f32 %v1916, 1e-08
      %v1949 = vmax.f32 %v1919, 1e-08
      %v1950 = vmax.f32 %v1922, 1e-08
      %v1951 = vmax.f32 %v1925, 1e-08
      %v1952 = vmax.f32 %v1928, 1e-08
      %v1953 = vmax.f32 %v1931, 1e-08
      %v1954 = vmax.f32 %v1934, 1e-08
      %v1955 = vmax.f32 %v1937, 1e-08
      %v1956 = vmax.f32 %v1940, 1e-08
      %v1957 = vmul.f32 %v1845, %v1845
      %v1958 = vmul.f32 %v1846, %v1846
      %v1959 = vmul.f32 %v1847, %v1847
      %v1960 = vmul.f32 %v1848, %v1848
      %v1961 = vmul.f32 %v1849, %v1849
      %v1962 = vmul.f32 %v1850, %v1850
      %v1963 = vmul.f32 %v1851, %v1851
      %v1964 = vmul.f32 %v1852, %v1852
      %v1965 = vmul.f32 %v1853, %v1853
      %v1966 = vmul.f32 %v1854, %v1854
      %v1967 = vmul.f32 %v1855, %v1855
      %v1968 = vmul.f32 %v1856, %v1856
      %v1969 = vmul.f32 %v1857, %v1857
      %v1970 = vmul.f32 %v1858, %v1858
      %v1971 = vmul.f32 %v1859, %v1859
      %v1972 = vmul.f32 %v1860, %v1860
      %v1973 = vsub.f32 %v1957, 1.0
      %v1974 = vsub.f32 %v1958, 1.0
      %v1975 = vsub.f32 %v1959, 1.0
      %v1976 = vsub.f32 %v1960, 1.0
      %v1977 = vsub.f32 %v1961, 1.0
      %v1978 = vsub.f32 %v1962, 1.0
      %v1979 = vsub.f32 %v1963, 1.0
      %v1980 = vsub.f32 %v1964, 1.0
      %v1981 = vsub.f32 %v1965, 1.0
      %v1982 = vsub.f32 %v1966, 1.0
      %v1983 = vsub.f32 %v1967, 1.0
      %v1984 = vsub.f32 %v1968, 1.0
      %v1985 = vsub.f32 %v1969, 1.0
      %v1986 = vsub.f32 %v1970, 1.0
      %v1987 = vsub.f32 %v1971, 1.0
      %v1988 = vsub.f32 %v1972, 1.0
      %v1989 = vmax.f32 %v1973, 1e-08
      %v1990 = vmax.f32 %v1974, 1e-08
      %v1991 = vmax.f32 %v1975, 1e-08
      %v1992 = vmax.f32 %v1976, 1e-08
      %v1993 = vmax.f32 %v1977, 1e-08
      %v1994 = vmax.f32 %v1978, 1e-08
      %v1995 = vmax.f32 %v1979, 1e-08
      %v1996 = vmax.f32 %v1980, 1e-08
      %v1997 = vmax.f32 %v1981, 1e-08
      %v1998 = vmax.f32 %v1982, 1e-08
      %v1999 = vmax.f32 %v1983, 1e-08
      %v2000 = vmax.f32 %v1984, 1e-08
      %v2001 = vmax.f32 %v1985, 1e-08
      %v2002 = vmax.f32 %v1986, 1e-08
      %v2003 = vmax.f32 %v1987, 1e-08
      %v2004 = vmax.f32 %v1988, 1e-08
      %v2005 = vrsqrt.pop %v1989
      %v2006 = vmul.f32 %v2005, %v1989
      %v2007 = vmul.f32 %v2006, %v2005
      %v2008 = vmul.f32 0.5, %v2007
      %v2009 = vsub.f32 1.5, %v2008
      %v2010 = vmul.f32 %v2005, %v2009
      %v2011 = vmul.f32 %v1989, %v2010
      %vm2012 = vcmp.eq.f32.partialorder %v1989, inf
      %v2013 = vsel %vm2012, %v1989, %v2011
      %vm2014 = vcmp.eq.f32.partialorder %v1989, 0.0
      %v2015 = vand.u32 %v1989, 2147483648
      %v2016 = vsel %vm2014, %v2015, %v2013
      %v2017 = vrsqrt.pop %v1990
      %v2018 = vmul.f32 %v2017, %v1990
      %v2019 = vmul.f32 %v2018, %v2017
      %v2020 = vmul.f32 0.5, %v2019
      %v2021 = vsub.f32 1.5, %v2020
      %v2022 = vmul.f32 %v2017, %v2021
      %v2023 = vmul.f32 %v1990, %v2022
      %vm2024 = vcmp.eq.f32.partialorder %v1990, inf
      %v2025 = vsel %vm2024, %v1990, %v2023
      %vm2026 = vcmp.eq.f32.partialorder %v1990, 0.0
      %v2027 = vand.u32 %v1990, 2147483648
      %v2028 = vsel %vm2026, %v2027, %v2025
      %v2029 = vrsqrt.pop %v1991
      %v2030 = vmul.f32 %v2029, %v1991
      %v2031 = vmul.f32 %v2030, %v2029
      %v2032 = vmul.f32 0.5, %v2031
      %v2033 = vsub.f32 1.5, %v2032
      %v2034 = vmul.f32 %v2029, %v2033
      %v2035 = vmul.f32 %v1991, %v2034
      %vm2036 = vcmp.eq.f32.partialorder %v1991, inf
      %v2037 = vsel %vm2036, %v1991, %v2035
      %vm2038 = vcmp.eq.f32.partialorder %v1991, 0.0
      %v2039 = vand.u32 %v1991, 2147483648
      %v2040 = vsel %vm2038, %v2039, %v2037
      %v2041 = vrsqrt.pop %v1992
      %v2042 = vmul.f32 %v2041, %v1992
      %v2043 = vmul.f32 %v2042, %v2041
      %v2044 = vmul.f32 0.5, %v2043
      %v2045 = vsub.f32 1.5, %v2044
      %v2046 = vmul.f32 %v2041, %v2045
      %v2047 = vmul.f32 %v1992, %v2046
      %vm2048 = vcmp.eq.f32.partialorder %v1992, inf
      %v2049 = vsel %vm2048, %v1992, %v2047
      %vm2050 = vcmp.eq.f32.partialorder %v1992, 0.0
      %v2051 = vand.u32 %v1992, 2147483648
      %v2052 = vsel %vm2050, %v2051, %v2049
      %v2053 = vrsqrt.pop %v1993
      %v2054 = vmul.f32 %v2053, %v1993
      %v2055 = vmul.f32 %v2054, %v2053
      %v2056 = vmul.f32 0.5, %v2055
      %v2057 = vsub.f32 1.5, %v2056
      %v2058 = vmul.f32 %v2053, %v2057
      %v2059 = vmul.f32 %v1993, %v2058
      %vm2060 = vcmp.eq.f32.partialorder %v1993, inf
      %v2061 = vsel %vm2060, %v1993, %v2059
      %vm2062 = vcmp.eq.f32.partialorder %v1993, 0.0
      %v2063 = vand.u32 %v1993, 2147483648
      %v2064 = vsel %vm2062, %v2063, %v2061
      %v2065 = vrsqrt.pop %v1994
      %v2066 = vmul.f32 %v2065, %v1994
      %v2067 = vmul.f32 %v2066, %v2065
      %v2068 = vmul.f32 0.5, %v2067
      %v2069 = vsub.f32 1.5, %v2068
      %v2070 = vmul.f32 %v2065, %v2069
      %v2071 = vmul.f32 %v1994, %v2070
      %vm2072 = vcmp.eq.f32.partialorder %v1994, inf
      %v2073 = vsel %vm2072, %v1994, %v2071
      %vm2074 = vcmp.eq.f32.partialorder %v1994, 0.0
      %v2075 = vand.u32 %v1994, 2147483648
      %v2076 = vsel %vm2074, %v2075, %v2073
      %v2077 = vrsqrt.pop %v1995
      %v2078 = vmul.f32 %v2077, %v1995
      %v2079 = vmul.f32 %v2078, %v2077
      %v2080 = vmul.f32 0.5, %v2079
      %v2081 = vsub.f32 1.5, %v2080
      %v2082 = vmul.f32 %v2077, %v2081
      %v2083 = vmul.f32 %v1995, %v2082
      %vm2084 = vcmp.eq.f32.partialorder %v1995, inf
      %v2085 = vsel %vm2084, %v1995, %v2083
      %vm2086 = vcmp.eq.f32.partialorder %v1995, 0.0
      %v2087 = vand.u32 %v1995, 2147483648
      %v2088 = vsel %vm2086, %v2087, %v2085
      %v2089 = vrsqrt.pop %v1996
      %v2090 = vmul.f32 %v2089, %v1996
      %v2091 = vmul.f32 %v2090, %v2089
      %v2092 = vmul.f32 0.5, %v2091
      %v2093 = vsub.f32 1.5, %v2092
      %v2094 = vmul.f32 %v2089, %v2093
      %v2095 = vmul.f32 %v1996, %v2094
      %vm2096 = vcmp.eq.f32.partialorder %v1996, inf
      %v2097 = vsel %vm2096, %v1996, %v2095
      %vm2098 = vcmp.eq.f32.partialorder %v1996, 0.0
      %v2099 = vand.u32 %v1996, 2147483648
      %v2100 = vsel %vm2098, %v2099, %v2097
      %v2101 = vrsqrt.pop %v1997
      %v2102 = vmul.f32 %v2101, %v1997
      %v2103 = vmul.f32 %v2102, %v2101
      %v2104 = vmul.f32 0.5, %v2103
      %v2105 = vsub.f32 1.5, %v2104
      %v2106 = vmul.f32 %v2101, %v2105
      %v2107 = vmul.f32 %v1997, %v2106
      %vm2108 = vcmp.eq.f32.partialorder %v1997, inf
      %v2109 = vsel %vm2108, %v1997, %v2107
      %vm2110 = vcmp.eq.f32.partialorder %v1997, 0.0
      %v2111 = vand.u32 %v1997, 2147483648
      %v2112 = vsel %vm2110, %v2111, %v2109
      %v2113 = vrsqrt.pop %v1998
      %v2114 = vmul.f32 %v2113, %v1998
      %v2115 = vmul.f32 %v2114, %v2113
      %v2116 = vmul.f32 0.5, %v2115
      %v2117 = vsub.f32 1.5, %v2116
      %v2118 = vmul.f32 %v2113, %v2117
      %v2119 = vmul.f32 %v1998, %v2118
      %vm2120 = vcmp.eq.f32.partialorder %v1998, inf
      %v2121 = vsel %vm2120, %v1998, %v2119
      %vm2122 = vcmp.eq.f32.partialorder %v1998, 0.0
      %v2123 = vand.u32 %v1998, 2147483648
      %v2124 = vsel %vm2122, %v2123, %v2121
      %v2125 = vrsqrt.pop %v1999
      %v2126 = vmul.f32 %v2125, %v1999
      %v2127 = vmul.f32 %v2126, %v2125
      %v2128 = vmul.f32 0.5, %v2127
      %v2129 = vsub.f32 1.5, %v2128
      %v2130 = vmul.f32 %v2125, %v2129
      %v2131 = vmul.f32 %v1999, %v2130
      %vm2132 = vcmp.eq.f32.partialorder %v1999, inf
      %v2133 = vsel %vm2132, %v1999, %v2131
      %vm2134 = vcmp.eq.f32.partialorder %v1999, 0.0
      %v2135 = vand.u32 %v1999, 2147483648
      %v2136 = vsel %vm2134, %v2135, %v2133
      %v2137 = vrsqrt.pop %v2000
      %v2138 = vmul.f32 %v2137, %v2000
      %v2139 = vmul.f32 %v2138, %v2137
      %v2140 = vmul.f32 0.5, %v2139
      %v2141 = vsub.f32 1.5, %v2140
      %v2142 = vmul.f32 %v2137, %v2141
      %v2143 = vmul.f32 %v2000, %v2142
      %vm2144 = vcmp.eq.f32.partialorder %v2000, inf
      %v2145 = vsel %vm2144, %v2000, %v2143
      %vm2146 = vcmp.eq.f32.partialorder %v2000, 0.0
      %v2147 = vand.u32 %v2000, 2147483648
      %v2148 = vsel %vm2146, %v2147, %v2145
      %v2149 = vrsqrt.pop %v2001
      %v2150 = vmul.f32 %v2149, %v2001
      %v2151 = vmul.f32 %v2150, %v2149
      %v2152 = vmul.f32 0.5, %v2151
      %v2153 = vsub.f32 1.5, %v2152
      %v2154 = vmul.f32 %v2149, %v2153
      %v2155 = vmul.f32 %v2001, %v2154
      %vm2156 = vcmp.eq.f32.partialorder %v2001, inf
      %v2157 = vsel %vm2156, %v2001, %v2155
      %vm2158 = vcmp.eq.f32.partialorder %v2001, 0.0
      %v2159 = vand.u32 %v2001, 2147483648
      %v2160 = vsel %vm2158, %v2159, %v2157
      %v2161 = vrsqrt.pop %v2002
      %v2162 = vmul.f32 %v2161, %v2002
      %v2163 = vmul.f32 %v2162, %v2161
      %v2164 = vmul.f32 0.5, %v2163
      %v2165 = vsub.f32 1.5, %v2164
      %v2166 = vmul.f32 %v2161, %v2165
      %v2167 = vmul.f32 %v2002, %v2166
      %vm2168 = vcmp.eq.f32.partialorder %v2002, inf
      %v2169 = vsel %vm2168, %v2002, %v2167
      %vm2170 = vcmp.eq.f32.partialorder %v2002, 0.0
      %v2171 = vand.u32 %v2002, 2147483648
      %v2172 = vsel %vm2170, %v2171, %v2169
      %v2173 = vrsqrt.pop %v2003
      %v2174 = vmul.f32 %v2173, %v2003
      %v2175 = vmul.f32 %v2174, %v2173
      %v2176 = vmul.f32 0.5, %v2175
      %v2177 = vsub.f32 1.5, %v2176
      %v2178 = vmul.f32 %v2173, %v2177
      %v2179 = vmul.f32 %v2003, %v2178
      %vm2180 = vcmp.eq.f32.partialorder %v2003, inf
      %v2181 = vsel %vm2180, %v2003, %v2179
      %vm2182 = vcmp.eq.f32.partialorder %v2003, 0.0
      %v2183 = vand.u32 %v2003, 2147483648
      %v2184 = vsel %vm2182, %v2183, %v2181
      %v2185 = vrsqrt.pop %v2004
      %v2186 = vmul.f32 %v2185, %v2004
      %v2187 = vmul.f32 %v2186, %v2185
      %v2188 = vmul.f32 0.5, %v2187
      %v2189 = vsub.f32 1.5, %v2188
      %v2190 = vmul.f32 %v2185, %v2189
      %v2191 = vmul.f32 %v2004, %v2190
      %vm2192 = vcmp.eq.f32.partialorder %v2004, inf
      %v2193 = vsel %vm2192, %v2004, %v2191
      %vm2194 = vcmp.eq.f32.partialorder %v2004, 0.0
      %v2195 = vand.u32 %v2004, 2147483648
      %v2196 = vsel %vm2194, %v2195, %v2193
      %v2197 = vrsqrt.pop %v1941
      %v2198 = vmul.f32 %v2197, %v1941
      %v2199 = vmul.f32 %v2198, %v2197
      %v2200 = vmul.f32 0.5, %v2199
      %v2201 = vsub.f32 1.5, %v2200
      %v2202 = vmul.f32 %v2197, %v2201
      %vm2203 = vweird.f32 %v1941
      %vm2204 = vweird.f32 %v2197
      %vm2205 = vmor %vm2203, %vm2204
      %v2206 = vsel %vm2205, %v2197, %v2202
      %v2207 = vrsqrt.pop %v1942
      %v2208 = vmul.f32 %v2207, %v1942
      %v2209 = vmul.f32 %v2208, %v2207
      %v2210 = vmul.f32 0.5, %v2209
      %v2211 = vsub.f32 1.5, %v2210
      %v2212 = vmul.f32 %v2207, %v2211
      %vm2213 = vweird.f32 %v1942
      %vm2214 = vweird.f32 %v2207
      %vm2215 = vmor %vm2213, %vm2214
      %v2216 = vsel %vm2215, %v2207, %v2212
      %v2217 = vrsqrt.pop %v1943
      %v2218 = vmul.f32 %v2217, %v1943
      %v2219 = vmul.f32 %v2218, %v2217
      %v2220 = vmul.f32 0.5, %v2219
      %v2221 = vsub.f32 1.5, %v2220
      %v2222 = vmul.f32 %v2217, %v2221
      %vm2223 = vweird.f32 %v1943
      %vm2224 = vweird.f32 %v2217
      %vm2225 = vmor %vm2223, %vm2224
      %v2226 = vsel %vm2225, %v2217, %v2222
      %v2227 = vrsqrt.pop %v1944
      %v2228 = vmul.f32 %v2227, %v1944
      %v2229 = vmul.f32 %v2228, %v2227
      %v2230 = vmul.f32 0.5, %v2229
      %v2231 = vsub.f32 1.5, %v2230
      %v2232 = vmul.f32 %v2227, %v2231
      %vm2233 = vweird.f32 %v1944
      %vm2234 = vweird.f32 %v2227
      %vm2235 = vmor %vm2233, %vm2234
      %v2236 = vsel %vm2235, %v2227, %v2232
      %v2237 = vrsqrt.pop %v1945
      %v2238 = vmul.f32 %v2237, %v1945
      %v2239 = vmul.f32 %v2238, %v2237
      %v2240 = vmul.f32 0.5, %v2239
      %v2241 = vsub.f32 1.5, %v2240
      %v2242 = vmul.f32 %v2237, %v2241
      %vm2243 = vweird.f32 %v1945
      %vm2244 = vweird.f32 %v2237
      %vm2245 = vmor %vm2243, %vm2244
      %v2246 = vsel %vm2245, %v2237, %v2242
      %v2247 = vrsqrt.pop %v1946
      %v2248 = vmul.f32 %v2247, %v1946
      %v2249 = vmul.f32 %v2248, %v2247
      %v2250 = vmul.f32 0.5, %v2249
      %v2251 = vsub.f32 1.5, %v2250
      %v2252 = vmul.f32 %v2247, %v2251
      %vm2253 = vweird.f32 %v1946
      %vm2254 = vweird.f32 %v2247
      %vm2255 = vmor %vm2253, %vm2254
      %v2256 = vsel %vm2255, %v2247, %v2252
      %v2257 = vrsqrt.pop %v1947
      %v2258 = vmul.f32 %v2257, %v1947
      %v2259 = vmul.f32 %v2258, %v2257
      %v2260 = vmul.f32 0.5, %v2259
      %v2261 = vsub.f32 1.5, %v2260
      %v2262 = vmul.f32 %v2257, %v2261
      %vm2263 = vweird.f32 %v1947
      %vm2264 = vweird.f32 %v2257
      %vm2265 = vmor %vm2263, %vm2264
      %v2266 = vsel %vm2265, %v2257, %v2262
      %v2267 = vrsqrt.pop %v1948
      %v2268 = vmul.f32 %v2267, %v1948
      %v2269 = vmul.f32 %v2268, %v2267
      %v2270 = vmul.f32 0.5, %v2269
      %v2271 = vsub.f32 1.5, %v2270
      %v2272 = vmul.f32 %v2267, %v2271
      %vm2273 = vweird.f32 %v1948
      %vm2274 = vweird.f32 %v2267
      %vm2275 = vmor %vm2273, %vm2274
      %v2276 = vsel %vm2275, %v2267, %v2272
      %v2277 = vrsqrt.pop %v1949
      %v2278 = vmul.f32 %v2277, %v1949
      %v2279 = vmul.f32 %v2278, %v2277
      %v2280 = vmul.f32 0.5, %v2279
      %v2281 = vsub.f32 1.5, %v2280
      %v2282 = vmul.f32 %v2277, %v2281
      %vm2283 = vweird.f32 %v1949
      %vm2284 = vweird.f32 %v2277
      %vm2285 = vmor %vm2283, %vm2284
      %v2286 = vsel %vm2285, %v2277, %v2282
      %v2287 = vrsqrt.pop %v1950
      %v2288 = vmul.f32 %v2287, %v1950
      %v2289 = vmul.f32 %v2288, %v2287
      %v2290 = vmul.f32 0.5, %v2289
      %v2291 = vsub.f32 1.5, %v2290
      %v2292 = vmul.f32 %v2287, %v2291
      %vm2293 = vweird.f32 %v1950
      %vm2294 = vweird.f32 %v2287
      %vm2295 = vmor %vm2293, %vm2294
      %v2296 = vsel %vm2295, %v2287, %v2292
      %v2297 = vrsqrt.pop %v1951
      %v2298 = vmul.f32 %v2297, %v1951
      %v2299 = vmul.f32 %v2298, %v2297
      %v2300 = vmul.f32 0.5, %v2299
      %v2301 = vsub.f32 1.5, %v2300
      %v2302 = vmul.f32 %v2297, %v2301
      %vm2303 = vweird.f32 %v1951
      %vm2304 = vweird.f32 %v2297
      %vm2305 = vmor %vm2303, %vm2304
      %v2306 = vsel %vm2305, %v2297, %v2302
      %v2307 = vrsqrt.pop %v1952
      %v2308 = vmul.f32 %v2307, %v1952
      %v2309 = vmul.f32 %v2308, %v2307
      %v2310 = vmul.f32 0.5, %v2309
      %v2311 = vsub.f32 1.5, %v2310
      %v2312 = vmul.f32 %v2307, %v2311
      %vm2313 = vweird.f32 %v1952
      %vm2314 = vweird.f32 %v2307
      %vm2315 = vmor %vm2313, %vm2314
      %v2316 = vsel %vm2315, %v2307, %v2312
      %v2317 = vrsqrt.pop %v1953
      %v2318 = vmul.f32 %v2317, %v1953
      %v2319 = vmul.f32 %v2318, %v2317
      %v2320 = vmul.f32 0.5, %v2319
      %v2321 = vsub.f32 1.5, %v2320
      %v2322 = vmul.f32 %v2317, %v2321
      %vm2323 = vweird.f32 %v1953
      %vm2324 = vweird.f32 %v2317
      %vm2325 = vmor %vm2323, %vm2324
      %v2326 = vsel %vm2325, %v2317, %v2322
      %v2327 = vrsqrt.pop %v1954
      %v2328 = vmul.f32 %v2327, %v1954
      %v2329 = vmul.f32 %v2328, %v2327
      %v2330 = vmul.f32 0.5, %v2329
      %v2331 = vsub.f32 1.5, %v2330
      %v2332 = vmul.f32 %v2327, %v2331
      %vm2333 = vweird.f32 %v1954
      %vm2334 = vweird.f32 %v2327
      %vm2335 = vmor %vm2333, %vm2334
      %v2336 = vsel %vm2335, %v2327, %v2332
      %v2337 = vrsqrt.pop %v1955
      %v2338 = vmul.f32 %v2337, %v1955
      %v2339 = vmul.f32 %v2338, %v2337
      %v2340 = vmul.f32 0.5, %v2339
      %v2341 = vsub.f32 1.5, %v2340
      %v2342 = vmul.f32 %v2337, %v2341
      %vm2343 = vweird.f32 %v1955
      %vm2344 = vweird.f32 %v2337
      %vm2345 = vmor %vm2343, %vm2344
      %v2346 = vsel %vm2345, %v2337, %v2342
      %v2347 = vrsqrt.pop %v1956
      %v2348 = vmul.f32 %v2347, %v1956
      %v2349 = vmul.f32 %v2348, %v2347
      %v2350 = vmul.f32 0.5, %v2349
      %v2351 = vsub.f32 1.5, %v2350
      %v2352 = vmul.f32 %v2347, %v2351
      %vm2353 = vweird.f32 %v1956
      %vm2354 = vweird.f32 %v2347
      %vm2355 = vmor %vm2353, %vm2354
      %v2356 = vsel %vm2355, %v2347, %v2352
      %v2357 = vmul.f32 %v2016, %v2206
      %v2358 = vmul.f32 %v2028, %v2216
      %v2359 = vmul.f32 %v2040, %v2226
      %v2360 = vmul.f32 %v2052, %v2236
      %v2361 = vmul.f32 %v2064, %v2246
      %v2362 = vmul.f32 %v2076, %v2256
      %v2363 = vmul.f32 %v2088, %v2266
      %v2364 = vmul.f32 %v2100, %v2276
      %v2365 = vmul.f32 %v2112, %v2286
      %v2366 = vmul.f32 %v2124, %v2296
      %v2367 = vmul.f32 %v2136, %v2306
      %v2368 = vmul.f32 %v2148, %v2316
      %v2369 = vmul.f32 %v2160, %v2326
      %v2370 = vmul.f32 %v2172, %v2336
      %v2371 = vmul.f32 %v2184, %v2346
      %v2372 = vmul.f32 %v2196, %v2356
      %2374 = vset.pattern.permute.xlu0 0
      %2375 = vperm.xlu0 %2374, %v2357
      %v2376 = vpop.permute.xlu0 %2375
      %2379 = vset.pattern.permute.xlu0 0
      %2380 = vperm.xlu0 %2379, %v2358
      %v2381 = vpop.permute.xlu0 %2380
      %2384 = vset.pattern.permute.xlu0 0
      %2385 = vperm.xlu0 %2384, %v2359
      %v2386 = vpop.permute.xlu0 %2385
      %2389 = vset.pattern.permute.xlu0 0
      %2390 = vperm.xlu0 %2389, %v2360
      %v2391 = vpop.permute.xlu0 %2390
      %2394 = vset.pattern.permute.xlu0 0
      %2395 = vperm.xlu0 %2394, %v2361
      %v2396 = vpop.permute.xlu0 %2395
      %2399 = vset.pattern.permute.xlu0 0
      %2400 = vperm.xlu0 %2399, %v2362
      %v2401 = vpop.permute.xlu0 %2400
      %2404 = vset.pattern.permute.xlu0 0
      %2405 = vperm.xlu0 %2404, %v2363
      %v2406 = vpop.permute.xlu0 %2405
      %2409 = vset.pattern.permute.xlu0 0
      %2410 = vperm.xlu0 %2409, %v2364
      %v2411 = vpop.permute.xlu0 %2410
      %2414 = vset.pattern.permute.xlu0 0
      %2415 = vperm.xlu0 %2414, %v2365
      %v2416 = vpop.permute.xlu0 %2415
      %2419 = vset.pattern.permute.xlu0 0
      %2420 = vperm.xlu0 %2419, %v2366
      %v2421 = vpop.permute.xlu0 %2420
      %2424 = vset.pattern.permute.xlu0 0
      %2425 = vperm.xlu0 %2424, %v2367
      %v2426 = vpop.permute.xlu0 %2425
      %2429 = vset.pattern.permute.xlu0 0
      %2430 = vperm.xlu0 %2429, %v2368
      %v2431 = vpop.permute.xlu0 %2430
      %2434 = vset.pattern.permute.xlu0 0
      %2435 = vperm.xlu0 %2434, %v2369
      %v2436 = vpop.permute.xlu0 %2435
      %2439 = vset.pattern.permute.xlu0 0
      %2440 = vperm.xlu0 %2439, %v2370
      %v2441 = vpop.permute.xlu0 %2440
      %2444 = vset.pattern.permute.xlu0 0
      %2445 = vperm.xlu0 %2444, %v2371
      %v2446 = vpop.permute.xlu0 %2445
      %2449 = vset.pattern.permute.xlu0 0
      %2450 = vperm.xlu0 %2449, %v2372
      %v2451 = vpop.permute.xlu0 %2450
      %v2453 = vmul.f32 %v436, %v2376
      %v2454 = vmul.f32 %v439, %v2381
      %v2455 = vmul.f32 %v442, %v2386
      %v2456 = vmul.f32 %v445, %v2391
      %v2457 = vmul.f32 %v448, %v2396
      %v2458 = vmul.f32 %v451, %v2401
      %v2459 = vmul.f32 %v454, %v2406
      %v2460 = vmul.f32 %v457, %v2411
      %v2461 = vmul.f32 %v460, %v2416
      %v2462 = vmul.f32 %v463, %v2421
      %v2463 = vmul.f32 %v466, %v2426
      %v2464 = vmul.f32 %v469, %v2431
      %v2465 = vmul.f32 %v472, %v2436
      %v2466 = vmul.f32 %v475, %v2441
      %v2467 = vmul.f32 %v478, %v2446
      %v2468 = vmul.f32 %v481, %v2451
      %2470 = vset.pattern.permute.xlu0 0
      %2471 = vperm.xlu0 %2470, %v1845
      %v2472 = vpop.permute.xlu0 %2471
      %2475 = vset.pattern.permute.xlu0 0
      %2476 = vperm.xlu0 %2475, %v1846
      %v2477 = vpop.permute.xlu0 %2476
      %2480 = vset.pattern.permute.xlu0 0
      %2481 = vperm.xlu0 %2480, %v1847
      %v2482 = vpop.permute.xlu0 %2481
      %2485 = vset.pattern.permute.xlu0 0
      %2486 = vperm.xlu0 %2485, %v1848
      %v2487 = vpop.permute.xlu0 %2486
      %2490 = vset.pattern.permute.xlu0 0
      %2491 = vperm.xlu0 %2490, %v1849
      %v2492 = vpop.permute.xlu0 %2491
      %2495 = vset.pattern.permute.xlu0 0
      %2496 = vperm.xlu0 %2495, %v1850
      %v2497 = vpop.permute.xlu0 %2496
      %2500 = vset.pattern.permute.xlu0 0
      %2501 = vperm.xlu0 %2500, %v1851
      %v2502 = vpop.permute.xlu0 %2501
      %2505 = vset.pattern.permute.xlu0 0
      %2506 = vperm.xlu0 %2505, %v1852
      %v2507 = vpop.permute.xlu0 %2506
      %2510 = vset.pattern.permute.xlu0 0
      %2511 = vperm.xlu0 %2510, %v1853
      %v2512 = vpop.permute.xlu0 %2511
      %2515 = vset.pattern.permute.xlu0 0
      %2516 = vperm.xlu0 %2515, %v1854
      %v2517 = vpop.permute.xlu0 %2516
      %2520 = vset.pattern.permute.xlu0 0
      %2521 = vperm.xlu0 %2520, %v1855
      %v2522 = vpop.permute.xlu0 %2521
      %2525 = vset.pattern.permute.xlu0 0
      %2526 = vperm.xlu0 %2525, %v1856
      %v2527 = vpop.permute.xlu0 %2526
      %2530 = vset.pattern.permute.xlu0 0
      %2531 = vperm.xlu0 %2530, %v1857
      %v2532 = vpop.permute.xlu0 %2531
      %2535 = vset.pattern.permute.xlu0 0
      %2536 = vperm.xlu0 %2535, %v1858
      %v2537 = vpop.permute.xlu0 %2536
      %2540 = vset.pattern.permute.xlu0 0
      %2541 = vperm.xlu0 %2540, %v1859
      %v2542 = vpop.permute.xlu0 %2541
      %2545 = vset.pattern.permute.xlu0 0
      %2546 = vperm.xlu0 %2545, %v1860
      %v2547 = vpop.permute.xlu0 %2546
      %v2549 = vsel %vm820, %v2472, %v2453
      %v2550 = vsel %vm820, %v2477, %v2454
      %v2551 = vsel %vm820, %v2482, %v2455
      %v2552 = vsel %vm820, %v2487, %v2456
      %v2553 = vsel %vm820, %v2492, %v2457
      %v2554 = vsel %vm820, %v2497, %v2458
      %v2555 = vsel %vm820, %v2502, %v2459
      %v2556 = vsel %vm820, %v2507, %v2460
      %v2557 = vsel %vm820, %v2512, %v2461
      %v2558 = vsel %vm820, %v2517, %v2462
      %v2559 = vsel %vm820, %v2522, %v2463
      %v2560 = vsel %vm820, %v2527, %v2464
      %v2561 = vsel %vm820, %v2532, %v2465
      %v2562 = vsel %vm820, %v2537, %v2466
      %v2563 = vsel %vm820, %v2542, %v2467
      %v2564 = vsel %vm820, %v2547, %v2468
      %v2565 = vsel %vm271, -0.35355338, 0.35355338
      %v2566 = vmul.f32 %v1509, %v2565
      %v2567 = vmul.f32 %v1510, %v2565
      %v2568 = vmul.f32 %v1511, %v2565
      %v2569 = vmul.f32 %v1512, %v2565
      %v2570 = vmul.f32 %v1513, %v2565
      %v2571 = vmul.f32 %v1514, %v2565
      %v2572 = vmul.f32 %v1515, %v2565
      %v2573 = vmul.f32 %v1516, %v2565
      %v2574 = vmul.f32 %v1517, %v2565
      %v2575 = vmul.f32 %v1518, %v2565
      %v2576 = vmul.f32 %v1519, %v2565
      %v2577 = vmul.f32 %v1520, %v2565
      %v2578 = vmul.f32 %v1521, %v2565
      %v2579 = vmul.f32 %v1522, %v2565
      %v2580 = vmul.f32 %v1523, %v2565
      %v2581 = vmul.f32 %v1524, %v2565
      %2582 = vst.msk [vmem:[%s261] sm:$0xff] %vm296, %v2566
      %2583 = vst.msk [vmem:[%s261 + $0x8] sm:$0xff] %vm296, %v2567
      %2584 = vst.msk [vmem:[%s261 + $0x10] sm:$0xff] %vm296, %v2568
      %2585 = vst.msk [vmem:[%s261 + $0x18] sm:$0xff] %vm296, %v2569
      %2586 = vst.msk [vmem:[%s261 + $0x20] sm:$0xff] %vm296, %v2570
      %2587 = vst.msk [vmem:[%s261 + $0x28] sm:$0xff] %vm296, %v2571
      %2588 = vst.msk [vmem:[%s261 + $0x30] sm:$0xff] %vm296, %v2572
      %2589 = vst.msk [vmem:[%s261 + $0x38] sm:$0xff] %vm296, %v2573
      %2590 = vst.msk [vmem:[%s261 + $0x40] sm:$0xff] %vm296, %v2574
      %2591 = vst.msk [vmem:[%s261 + $0x48] sm:$0xff] %vm296, %v2575
      %2592 = vst.msk [vmem:[%s261 + $0x50] sm:$0xff] %vm296, %v2576
      %2593 = vst.msk [vmem:[%s261 + $0x58] sm:$0xff] %vm296, %v2577
      %2594 = vst.msk [vmem:[%s261 + $0x60] sm:$0xff] %vm296, %v2578
      %2595 = vst.msk [vmem:[%s261 + $0x68] sm:$0xff] %vm296, %v2579
      %2596 = vst.msk [vmem:[%s261 + $0x70] sm:$0xff] %vm296, %v2580
      %2597 = vst.msk [vmem:[%s261 + $0x78] sm:$0xff] %vm296, %v2581
      %2598 = vst.msk [vmem:[%s267] sm:$0xff] %vm296, %v2549
      %2599 = vst.msk [vmem:[%s267 + $0x8] sm:$0xff] %vm296, %v2550
      %2600 = vst.msk [vmem:[%s267 + $0x10] sm:$0xff] %vm296, %v2551
      %2601 = vst.msk [vmem:[%s267 + $0x18] sm:$0xff] %vm296, %v2552
      %2602 = vst.msk [vmem:[%s267 + $0x20] sm:$0xff] %vm296, %v2553
      %2603 = vst.msk [vmem:[%s267 + $0x28] sm:$0xff] %vm296, %v2554
      %2604 = vst.msk [vmem:[%s267 + $0x30] sm:$0xff] %vm296, %v2555
      %2605 = vst.msk [vmem:[%s267 + $0x38] sm:$0xff] %vm296, %v2556
      %2606 = vst.msk [vmem:[%s267 + $0x40] sm:$0xff] %vm296, %v2557
      %2607 = vst.msk [vmem:[%s267 + $0x48] sm:$0xff] %vm296, %v2558
      %2608 = vst.msk [vmem:[%s267 + $0x50] sm:$0xff] %vm296, %v2559
      %2609 = vst.msk [vmem:[%s267 + $0x58] sm:$0xff] %vm296, %v2560
      %2610 = vst.msk [vmem:[%s267 + $0x60] sm:$0xff] %vm296, %v2561
      %2611 = vst.msk [vmem:[%s267 + $0x68] sm:$0xff] %vm296, %v2562
      %2612 = vst.msk [vmem:[%s267 + $0x70] sm:$0xff] %vm296, %v2563
      %2613 = vst.msk [vmem:[%s267 + $0x78] sm:$0xff] %vm296, %v2564
      %s2614 = smul.u32 16, %s18
      %p2615 = scmp.lt.s32.totalorder %s2614, 31
      %s2616 = scalar_select %p2615, %s2614, 31
      %s2617 = smul.addr %s2616, 8
      %s2618 = scalar_lea.vmem %s5, %s2617
      %s2619 = smul.u32 16, %s18
      %p2620 = scmp.lt.s32.totalorder %s2619, 31
      %s2621 = scalar_select %p2620, %s2619, 31
      %s2622 = smul.addr %s2621, 8
      %s2623 = scalar_lea.vmem %s6, %s2622
      // Predicated region
      $region41: #{tpu_custom_call.1} parent=39 // pred_check
        %p2624 = pneg %p146
      $region42: #{tpu_custom_call.1} parent=39 // pred_check_branch
        %2626 = sbr.rel (%p2624) target = $region44
      $region43: #{tpu_custom_call.1} parent=39 // pred_region
        %s2627 = smul.u32 16, %s18
      $region44: #{tpu_custom_call.1} parent=39 // pred_fallthru
        _
      // Predicated region
      $region45: #{tpu_custom_call.1} parent=39 // pred_check
        %p2628 = pneg %p172
      $region46: #{tpu_custom_call.1} parent=39 // pred_check_branch
        %2630 = sbr.rel (%p2628) target = $region48
      $region47: #{tpu_custom_call.1} parent=39 // pred_region
        %s2631 = smul.u32 16, %s18
      $region48: #{tpu_custom_call.1} parent=39 // pred_fallthru
        _
    $region40: #{tpu_custom_call.1} parent=5 // pred_fallthru
      _
    %p2632 = scmp.le.s32.totalorder 2, %s13
    // Predicated region
    $region49: #{tpu_custom_call.1} parent=5 // pred_check
      %p2633 = pneg %p2632
    $region50: #{tpu_custom_call.1} parent=5 // pred_check_branch
      %2635 = sbr.rel (%p2633) target = $region52
    $region51: #{tpu_custom_call.1} parent=5 // pred_region
      %s2636 = ssub.s32 %s13, 2
      // Predicated region
      $region53: #{tpu_custom_call.1} parent=51 // pred_check
        %p2637 = pneg %p152
      $region54: #{tpu_custom_call.1} parent=51 // pred_check_branch
        %2639 = sbr.rel (%p2637) target = $region56
      $region55: #{tpu_custom_call.1} parent=51 // pred_region
        %s2640 = smul.u32 16, %s19
        %p2641 = scmp.lt.s32.totalorder %s2640, 31
        %s2642 = scalar_select %p2641, %s2640, 31
        %s2643 = smul.addr %s2642, 8
        %s2644 = scalar_lea.vmem %s5, %s2643
      $region56: #{tpu_custom_call.1} parent=51 // pred_fallthru
        _
      // Predicated region
      $region57: #{tpu_custom_call.1} parent=51 // pred_check
        %p2645 = pneg %p178
      $region58: #{tpu_custom_call.1} parent=51 // pred_check_branch
        %2647 = sbr.rel (%p2645) target = $region60
      $region59: #{tpu_custom_call.1} parent=51 // pred_region
        %s2648 = smul.u32 16, %s19
        %p2649 = scmp.lt.s32.totalorder %s2648, 31
        %s2650 = scalar_select %p2649, %s2648, 31
        %s2651 = smul.addr %s2650, 8
        %s2652 = scalar_lea.vmem %s6, %s2651
      $region60: #{tpu_custom_call.1} parent=51 // pred_fallthru
        _
    $region52: #{tpu_custom_call.1} parent=5 // pred_fallthru
      _
  $region6: #{tpu_custom_call.1} parent=0 // loop_footer
    %s17 = sadd.s32 1, %s13
  $region7: #{tpu_custom_call.1} parent=0 // loop_footer_branch
    %12 = sbr.rel target = $region3
  $region8: #{tpu_custom_call.1} parent=0 // loop_exit
    _

</llo_original>
